<compile_context>
chip_gen: v7x
topology: tpu7x:2x2x1
jax: 0.10.0
libtpu: 0.0.40
codegen_flags: <defaults>
</compile_context>

<pallas_src>
from functools import partial

import jax
import jax.numpy as jnp
from jax.experimental import pallas as pl
from jax.experimental.pallas import tpu as pltpu


def _attn_survival_kernel(x_ref, wcat_ref, wr_row_ref, ww_row_ref, bv_ref, bu_ref,
                          scal_ref, out_ref, m_scr, num_scr, den_scr):
    i = pl.program_id(0)
    nsteps = pl.num_programs(0)
    D = bv_ref.shape[1]                      # static python int

    @pl.when(i == 0)
    def _init():
        m_scr[...] = jnp.full_like(m_scr, -jnp.inf)
        num_scr[...] = jnp.zeros_like(num_scr)
        den_scr[...] = jnp.zeros_like(den_scr)

    x = x_ref[...]                           # (TN, L) f32

    # Single clean MXU matmul: exactly 2D output columns ([Wv | Wu]).
    # If W_cat was prepared in bf16 the cast puts both operands in the fast
    # MXU format; accumulation stays f32.
    h = jnp.dot(x.astype(wcat_ref.dtype), wcat_ref[...],
                preferred_element_type=jnp.float32)          # (TN, 2D) f32

    av = jnp.tanh(h[:, :D] + bv_ref[...])                    # (TN, D)
    au = jax.nn.sigmoid(h[:, D:] + bu_ref[...])              # (TN, D)

    # K == 1 attention logits: VPU multiply + lane (axis=-1) reduce, MXU stays clean.
    a = jnp.sum((av * au) * ww_row_ref[...], axis=1, keepdims=True) + scal_ref[0]  # (TN,1)

    # Reassociated survival head: per-instance value xr_n = x_n . Wr (VPU + XLU).
    xr = jnp.sum(x * wr_row_ref[...], axis=1, keepdims=True)                       # (TN,1)

    # Online softmax over instances with deferred normalization:
    #   risk = (sum_n exp(a_n - m) * xr_n) / (sum_n exp(a_n - m)) + br
    tile_max = jnp.max(a, axis=0, keepdims=True)             # (1,1)
    m_old = m_scr[...]
    m_new = jnp.maximum(m_old, tile_max)
    alpha = jnp.exp(m_old - m_new)                           # 0 on first step (exp(-inf))
    e = jnp.exp(a - m_new)                                   # (TN,1)
    num_scr[...] = alpha * num_scr[...] + jnp.sum(e * xr, axis=0, keepdims=True)
    den_scr[...] = alpha * den_scr[...] + jnp.sum(e, axis=0, keepdims=True)
    m_scr[...] = m_new

    @pl.when(i == nsteps - 1)
    def _finalize():
        # Exact reciprocal keeps the 1e-4 check tight; approx=True moves it to EUP.
        out_ref[...] = (num_scr[...] * pl.reciprocal(den_scr[...], approx=False)
                        + scal_ref[1])


def prepare_params(params, mxu_dtype=jnp.float32):
    """Build kernel-ready weights ONCE (outside the per-call jit).

    mxu_dtype=jnp.bfloat16 enables the fast MXU format on v6e/v7x (expect ~1e-3
    relative error vs the f32 reference)."""
    wv, bv, wu, bu, ww, bw, wr, br = params
    L, D = wv.shape
    K = ww.shape[1]
    assert K == 1, "reassociated survival head assumes K == 1 (module default)"
    w_cat = jnp.concatenate([wv, wu], axis=1).astype(mxu_dtype)      # (L, 2D)
    wr_row = wr.reshape(1, L).astype(jnp.float32)                    # (1, L)
    ww_row = ww.reshape(1, D).astype(jnp.float32)                    # (1, D)
    bv_row = bv.reshape(1, D).astype(jnp.float32)
    bu_row = bu.reshape(1, D).astype(jnp.float32)
    scal = jnp.stack([bw.reshape(()), br.reshape(())]).astype(jnp.float32)  # (2,) = [bw, br]
    return (w_cat, wr_row, ww_row, bv_row, bu_row, scal)


@partial(jax.jit, static_argnames=("tn",))
def attention_with_survival_classifier(x, prepared, tn=None):
    """x: (N, L) float32 bag.  Returns {'risk_score': (1,) float32}."""
    w_cat, wr_row, ww_row, bv_row, bu_row, scal = prepared
    N, L = x.shape
    D = bv_row.shape[1]
    two_d = w_cat.shape[1]

    if tn is None:
        tn = N if N <= 512 else 512
    assert N % tn == 0 and tn % 8 == 0, "N must be divisible by tn (multiple of 8)"
    grid = (N // tn,)

    # Double-buffered x tiles + resident weights, with headroom; capped at 64 MiB
    # so the request is valid on v7x physical VMEM (v5e default limit is 16 MiB).
    est = 2 * tn * L * x.dtype.itemsize + 2 * int(w_cat.nbytes) + (4 << 20)
    vmem_limit = int(min(max(est, 32 << 20), 64 << 20))

    out = pl.pallas_call(
        _attn_survival_kernel,
        out_shape=jax.ShapeDtypeStruct((1, 1), jnp.float32),
        grid_spec=pltpu.PrefetchScalarGridSpec(
            num_scalar_prefetch=0,
            grid=grid,
            in_specs=[
                pl.BlockSpec((tn, L), lambda i: (i, 0)),              # x tile (streamed)
                pl.BlockSpec((L, two_d), lambda i: (0, 0)),           # W_cat = [Wv|Wu] (resident)
                pl.BlockSpec((1, L), lambda i: (0, 0)),               # wr row (resident)
                pl.BlockSpec((1, D), lambda i: (0, 0)),               # ww row (resident)
                pl.BlockSpec((1, D), lambda i: (0, 0)),               # bv
                pl.BlockSpec((1, D), lambda i: (0, 0)),               # bu
                pl.BlockSpec(memory_space=pltpu.MemorySpace.SMEM),    # [bw, br] scalars
            ],
            out_specs=pl.BlockSpec((1, 1), lambda i: (0, 0)),         # resident accumulator
            scratch_shapes=[pltpu.VMEM((1, 1), jnp.float32),          # running max
                            pltpu.VMEM((1, 1), jnp.float32),          # running numerator
                            pltpu.VMEM((1, 1), jnp.float32)],         # running denominator
        ),
        compiler_params=pltpu.CompilerParams(
            dimension_semantics=("arbitrary",),
            vmem_limit_bytes=vmem_limit),
    )(x, w_cat, wr_row, ww_row, bv_row, bu_row, scal)

    # torch: M.squeeze(0) @ Wr + br -> (1,) for K == 1.
    return {'risk_score': out.reshape(1)}


def init_params(key, L, D, K):
    ks = jax.random.split(key, 8)
    scale = 0.1
    wv = scale * jax.random.normal(ks[0], (L, D), jnp.float32)
    bv = scale * jax.random.normal(ks[1], (1, D), jnp.float32)
    wu = scale * jax.random.normal(ks[2], (L, D), jnp.float32)
    bu = scale * jax.random.normal(ks[3], (1, D), jnp.float32)
    ww = scale * jax.random.normal(ks[4], (D, K), jnp.float32)
    bw = scale * jax.random.normal(ks[5], (1, K), jnp.float32)
    wr = scale * jax.random.normal(ks[6], (L, 1), jnp.float32)
    br = scale * jax.random.normal(ks[7], (1, 1), jnp.float32)
    return (wv, bv, wu, bu, ww, bw, wr, br)


def reference_forward(x, params):
    """Pure-JAX reference mirroring the PyTorch forward (droprate = 0)."""
    wv, bv, wu, bu, ww, bw, wr, br = params
    a_v = jnp.tanh(x @ wv + bv)
    a_u = jax.nn.sigmoid(x @ wu + bu)
    a = (a_v * a_u) @ ww + bw            # (N, K)
    a = a.T                              # (K, N)
    a = jax.nn.softmax(a, axis=1)
    m = a @ x                            # (K, L)
    risk = m.reshape(-1) @ wr + br.reshape(-1)   # (1,)
    return risk


if __name__ == "__main__":
    # Module defaults L=512, D=128, K=1; N=512 instances so the grid runs 4
    # online-softmax steps (tn=128).
    N, L, D, K = 512, 512, 128, 1

    key = jax.random.PRNGKey(0)
    kx, kp = jax.random.split(key)
    x = jax.random.normal(kx, (N, L), jnp.float32)
    params = init_params(kp, L, D, K)

    prepared = prepare_params(params)     # built once, outside the jitted forward
    out = attention_with_survival_classifier(x, prepared, tn=128)
    risk = jax.block_until_ready(out['risk_score'])

    ref = reference_forward(x, params)
    assert risk.shape == (K,)
    assert jnp.allclose(risk, ref, atol=1e-4, rtol=1e-4), (risk, ref)

    print("KERNEL_OK")
</pallas_src>

<mosaic_0001>
module attributes {stable_mosaic.version = 11 : i64} {
  func.func @_attn_survival_kernel(%arg0: i32, %arg1: memref<128x512xf32, #tpu.memory_space<vmem>>, %arg2: memref<512x256xf32, #tpu.memory_space<vmem>>, %arg3: memref<1x512xf32, #tpu.memory_space<vmem>>, %arg4: memref<1x128xf32, #tpu.memory_space<vmem>>, %arg5: memref<1x128xf32, #tpu.memory_space<vmem>>, %arg6: memref<1x128xf32, #tpu.memory_space<vmem>>, %arg7: memref<2xf32, #tpu.memory_space<smem>>, %arg8: memref<1x1xf32, #tpu.memory_space<vmem>>, %arg9: memref<1x1xf32, #tpu.memory_space<vmem>>, %arg10: memref<1x1xf32, #tpu.memory_space<vmem>>, %arg11: memref<1x1xf32, #tpu.memory_space<vmem>>) attributes {dimension_semantics = [#tpu.dimension_semantics<arbitrary>], iteration_bounds = array<i64: 4>, scalar_prefetch = 0 : i64, scratch_operands = 3 : i64, tpu.core_type = #tpu.core_type<tc>, window_params = [{transform_indices = @transform_0, window_bounds = array<i64: 128, 512>}, {pipeline_mode = #tpu.pipeline_mode<synchronous>, transform_indices = @transform_1, window_bounds = array<i64: 512, 256>}, {pipeline_mode = #tpu.pipeline_mode<synchronous>, transform_indices = @transform_2, window_bounds = array<i64: 1, 512>}, {pipeline_mode = #tpu.pipeline_mode<synchronous>, transform_indices = @transform_3, window_bounds = array<i64: 1, 128>}, {pipeline_mode = #tpu.pipeline_mode<synchronous>, transform_indices = @transform_4, window_bounds = array<i64: 1, 128>}, {pipeline_mode = #tpu.pipeline_mode<synchronous>, transform_indices = @transform_5, window_bounds = array<i64: 1, 128>}, {transform_indices = @transform_6, window_bounds = array<i64: 2>}, {pipeline_mode = #tpu.pipeline_mode<synchronous>, transform_indices = @transform_7, window_bounds = array<i64: 1, 1>}]} {
    %c0_i32 = arith.constant 0 : i32
    %0 = arith.cmpi eq, %arg0, %c0_i32 : i32
    %1 = arith.extui %0 : i1 to i32
    %c0_i32_0 = arith.constant 0 : i32
    %2 = arith.cmpi ne, %1, %c0_i32_0 : i32
    scf.if %2 {
      %cst_32 = arith.constant 0xFF800000 : f32
      %60 = vector.broadcast %cst_32 : f32 to vector<1x1xf32>
      %c0_33 = arith.constant 0 : index
      %c0_34 = arith.constant 0 : index
      %61 = vector.load %arg9[%c0_33, %c0_34] : memref<1x1xf32, #tpu.memory_space<vmem>>, vector<1x1xf32>
      tpu.vector_store %arg9[%c0_33, %c0_34], %60 {strides = array<i32>} : memref<1x1xf32, #tpu.memory_space<vmem>>, vector<1x1xf32>,
      %cst_35 = arith.constant 0.000000e+00 : f32
      %62 = vector.broadcast %cst_35 : f32 to vector<1x1xf32>
      %c0_36 = arith.constant 0 : index
      %c0_37 = arith.constant 0 : index
      %63 = vector.load %arg10[%c0_36, %c0_37] : memref<1x1xf32, #tpu.memory_space<vmem>>, vector<1x1xf32>
      tpu.vector_store %arg10[%c0_36, %c0_37], %62 {strides = array<i32>} : memref<1x1xf32, #tpu.memory_space<vmem>>, vector<1x1xf32>,
      %cst_38 = arith.constant 0.000000e+00 : f32
      %64 = vector.broadcast %cst_38 : f32 to vector<1x1xf32>
      %c0_39 = arith.constant 0 : index
      %c0_40 = arith.constant 0 : index
      %65 = vector.load %arg11[%c0_39, %c0_40] : memref<1x1xf32, #tpu.memory_space<vmem>>, vector<1x1xf32>
      tpu.vector_store %arg11[%c0_39, %c0_40], %64 {strides = array<i32>} : memref<1x1xf32, #tpu.memory_space<vmem>>, vector<1x1xf32>,
    } else {
    }
    %c0 = arith.constant 0 : index
    %c0_1 = arith.constant 0 : index
    %3 = vector.load %arg1[%c0, %c0_1] : memref<128x512xf32, #tpu.memory_space<vmem>>, vector<128x512xf32>
    %c0_2 = arith.constant 0 : index
    %c0_3 = arith.constant 0 : index
    %4 = vector.load %arg2[%c0_2, %c0_3] : memref<512x256xf32, #tpu.memory_space<vmem>>, vector<512x256xf32>
    %cst = arith.constant dense<0.000000e+00> : vector<128x256xf32>
    %5 = tpu.matmul %3, %4, %cst {dimension_numbers = #tpu.dot_dimension_numbers<[1], [0], [0], [1], [0, 0, 1, 1], [], []>} : vector<128x512xf32>, vector<512x256xf32>, vector<128x256xf32> -> vector<128x256xf32>
    %6 = vector.extract_strided_slice %5 {offsets = [0, 0], sizes = [128, 128], strides = [1, 1]} : vector<128x256xf32> to vector<128x128xf32>
    %c0_4 = arith.constant 0 : index
    %c0_5 = arith.constant 0 : index
    %7 = vector.load %arg5[%c0_4, %c0_5] : memref<1x128xf32, #tpu.memory_space<vmem>>, vector<1x128xf32>
    %8 = vector.broadcast %7 : vector<1x128xf32> to vector<128x128xf32>
    %9 = arith.addf %6, %8 : vector<128x128xf32>
    %10 = math.tanh %9 : vector<128x128xf32>
    %11 = vector.extract_strided_slice %5 {offsets = [0, 128], sizes = [128, 128], strides = [1, 1]} : vector<128x256xf32> to vector<128x128xf32>
    %c0_6 = arith.constant 0 : index
    %c0_7 = arith.constant 0 : index
    %12 = vector.load %arg6[%c0_6, %c0_7] : memref<1x128xf32, #tpu.memory_space<vmem>>, vector<1x128xf32>
    %13 = vector.broadcast %12 : vector<1x128xf32> to vector<128x128xf32>
    %14 = arith.addf %11, %13 : vector<128x128xf32>
    %15 = arith.negf %14 : vector<128x128xf32>
    %16 = math.exp %15 : vector<128x128xf32>
    %cst_8 = arith.constant 1.000000e+00 : f32
    %17 = vector.broadcast %cst_8 : f32 to vector<128x128xf32>
    %18 = arith.addf %17, %16 : vector<128x128xf32>
    %19 = arith.divf %17, %18 : vector<128x128xf32>
    %20 = arith.mulf %10, %19 : vector<128x128xf32>
    %c0_9 = arith.constant 0 : index
    %c0_10 = arith.constant 0 : index
    %21 = vector.load %arg4[%c0_9, %c0_10] : memref<1x128xf32, #tpu.memory_space<vmem>>, vector<1x128xf32>
    %22 = vector.broadcast %21 : vector<1x128xf32> to vector<128x128xf32>
    %23 = arith.mulf %20, %22 : vector<128x128xf32>
    %cst_11 = arith.constant dense<0.000000e+00> : vector<128xf32>
    %24 = vector.multi_reduction <add>, %23, %cst_11 [1] : vector<128x128xf32> to vector<128xf32>
    %25 = vector.shape_cast %24 : vector<128xf32> to vector<128x1xf32>
    %c0_12 = arith.constant 0 : index
    %26 = memref.load %arg7[%c0_12] : memref<2xf32, #tpu.memory_space<smem>>
    %27 = vector.broadcast %26 : f32 to vector<128x1xf32>
    %28 = arith.addf %25, %27 : vector<128x1xf32>
    %c0_13 = arith.constant 0 : index
    %c0_14 = arith.constant 0 : index
    %29 = vector.load %arg3[%c0_13, %c0_14] : memref<1x512xf32, #tpu.memory_space<vmem>>, vector<1x512xf32>
    %30 = vector.broadcast %29 : vector<1x512xf32> to vector<128x512xf32>
    %31 = arith.mulf %3, %30 : vector<128x512xf32>
    %cst_15 = arith.constant dense<0.000000e+00> : vector<128xf32>
    %32 = vector.multi_reduction <add>, %31, %cst_15 [1] : vector<128x512xf32> to vector<128xf32>
    %33 = vector.shape_cast %32 : vector<128xf32> to vector<128x1xf32>
    %cst_16 = arith.constant dense<0xFF800000> : vector<1xf32>
    %34 = vector.multi_reduction <maximumf>, %28, %cst_16 [0] : vector<128x1xf32> to vector<1xf32>
    %35 = vector.shape_cast %34 : vector<1xf32> to vector<1x1xf32>
    %c0_17 = arith.constant 0 : index
    %c0_18 = arith.constant 0 : index
    %36 = vector.load %arg9[%c0_17, %c0_18] : memref<1x1xf32, #tpu.memory_space<vmem>>, vector<1x1xf32>
    %37 = arith.maximumf %36, %35 : vector<1x1xf32>
    %38 = arith.subf %36, %37 : vector<1x1xf32>
    %39 = math.exp %38 : vector<1x1xf32>
    %40 = vector.broadcast %37 : vector<1x1xf32> to vector<128x1xf32>
    %41 = arith.subf %28, %40 : vector<128x1xf32>
    %42 = math.exp %41 : vector<128x1xf32>
    %c0_19 = arith.constant 0 : index
    %c0_20 = arith.constant 0 : index
    %43 = vector.load %arg10[%c0_19, %c0_20] : memref<1x1xf32, #tpu.memory_space<vmem>>, vector<1x1xf32>
    %44 = arith.mulf %39, %43 : vector<1x1xf32>
    %45 = arith.mulf %42, %33 : vector<128x1xf32>
    %cst_21 = arith.constant dense<0.000000e+00> : vector<1xf32>
    %46 = vector.multi_reduction <add>, %45, %cst_21 [0] : vector<128x1xf32> to vector<1xf32>
    %47 = vector.shape_cast %46 : vector<1xf32> to vector<1x1xf32>
    %48 = arith.addf %44, %47 : vector<1x1xf32>
    %c0_22 = arith.constant 0 : index
    %c0_23 = arith.constant 0 : index
    %49 = vector.load %arg10[%c0_22, %c0_23] : memref<1x1xf32, #tpu.memory_space<vmem>>, vector<1x1xf32>
    tpu.vector_store %arg10[%c0_22, %c0_23], %48 {strides = array<i32>} : memref<1x1xf32, #tpu.memory_space<vmem>>, vector<1x1xf32>,
    %c0_24 = arith.constant 0 : index
    %c0_25 = arith.constant 0 : index
    %50 = vector.load %arg11[%c0_24, %c0_25] : memref<1x1xf32, #tpu.memory_space<vmem>>, vector<1x1xf32>
    %51 = arith.mulf %39, %50 : vector<1x1xf32>
    %cst_26 = arith.constant dense<0.000000e+00> : vector<1xf32>
    %52 = vector.multi_reduction <add>, %42, %cst_26 [0] : vector<128x1xf32> to vector<1xf32>
    %53 = vector.shape_cast %52 : vector<1xf32> to vector<1x1xf32>
    %54 = arith.addf %51, %53 : vector<1x1xf32>
    %c0_27 = arith.constant 0 : index
    %c0_28 = arith.constant 0 : index
    %55 = vector.load %arg11[%c0_27, %c0_28] : memref<1x1xf32, #tpu.memory_space<vmem>>, vector<1x1xf32>
    tpu.vector_store %arg11[%c0_27, %c0_28], %54 {strides = array<i32>} : memref<1x1xf32, #tpu.memory_space<vmem>>, vector<1x1xf32>,
    %c0_29 = arith.constant 0 : index
    %c0_30 = arith.constant 0 : index
    %56 = vector.load %arg9[%c0_29, %c0_30] : memref<1x1xf32, #tpu.memory_space<vmem>>, vector<1x1xf32>
    tpu.vector_store %arg9[%c0_29, %c0_30], %37 {strides = array<i32>} : memref<1x1xf32, #tpu.memory_space<vmem>>, vector<1x1xf32>,
    %c3_i32 = arith.constant 3 : i32
    %57 = arith.cmpi eq, %arg0, %c3_i32 : i32
    %58 = arith.extui %57 : i1 to i32
    %c0_i32_31 = arith.constant 0 : i32
    %59 = arith.cmpi ne, %58, %c0_i32_31 : i32
    scf.if %59 {
      %c0_32 = arith.constant 0 : index
      %c0_33 = arith.constant 0 : index
      %60 = vector.load %arg10[%c0_32, %c0_33] : memref<1x1xf32, #tpu.memory_space<vmem>>, vector<1x1xf32>
      %c0_34 = arith.constant 0 : index
      %c0_35 = arith.constant 0 : index
      %61 = vector.load %arg11[%c0_34, %c0_35] : memref<1x1xf32, #tpu.memory_space<vmem>>, vector<1x1xf32>
      %62 = tpu.reciprocal %61 : vector<1x1xf32> -> vector<1x1xf32>
      %63 = arith.mulf %60, %62 : vector<1x1xf32>
      %c1 = arith.constant 1 : index
      %64 = memref.load %arg7[%c1] : memref<2xf32, #tpu.memory_space<smem>>
      %65 = vector.broadcast %64 : f32 to vector<1x1xf32>
      %66 = arith.addf %63, %65 : vector<1x1xf32>
      %c0_36 = arith.constant 0 : index
      %c0_37 = arith.constant 0 : index
      %67 = vector.load %arg8[%c0_36, %c0_37] : memref<1x1xf32, #tpu.memory_space<vmem>>, vector<1x1xf32>
      tpu.vector_store %arg8[%c0_36, %c0_37], %66 {strides = array<i32>} : memref<1x1xf32, #tpu.memory_space<vmem>>, vector<1x1xf32>,
    } else {
    }
    return
  }
  func.func @transform_0(%arg0: i32) -> (i32, i32) {
    %c0_i32 = arith.constant 0 : i32
    %c0_i32_0 = arith.constant 0 : i32
    return %arg0, %c0_i32 : i32, i32
  }
  func.func @transform_1(%arg0: i32) -> (i32, i32) {
    %c0_i32 = arith.constant 0 : i32
    %c0_i32_0 = arith.constant 0 : i32
    %c0_i32_1 = arith.constant 0 : i32
    return %c0_i32, %c0_i32_0 : i32, i32
  }
  func.func @transform_2(%arg0: i32) -> (i32, i32) {
    %c0_i32 = arith.constant 0 : i32
    %c0_i32_0 = arith.constant 0 : i32
    %c0_i32_1 = arith.constant 0 : i32
    return %c0_i32, %c0_i32_0 : i32, i32
  }
  func.func @transform_3(%arg0: i32) -> (i32, i32) {
    %c0_i32 = arith.constant 0 : i32
    %c0_i32_0 = arith.constant 0 : i32
    %c0_i32_1 = arith.constant 0 : i32
    return %c0_i32, %c0_i32_0 : i32, i32
  }
  func.func @transform_4(%arg0: i32) -> (i32, i32) {
    %c0_i32 = arith.constant 0 : i32
    %c0_i32_0 = arith.constant 0 : i32
    %c0_i32_1 = arith.constant 0 : i32
    return %c0_i32, %c0_i32_0 : i32, i32
  }
  func.func @transform_5(%arg0: i32) -> (i32, i32) {
    %c0_i32 = arith.constant 0 : i32
    %c0_i32_0 = arith.constant 0 : i32
    %c0_i32_1 = arith.constant 0 : i32
    return %c0_i32, %c0_i32_0 : i32, i32
  }
  func.func @transform_6(%arg0: i32) -> i32 {
    %c0_i32 = arith.constant 0 : i32
    %c0_i32_0 = arith.constant 0 : i32
    return %c0_i32 : i32
  }
  func.func @transform_7(%arg0: i32) -> (i32, i32) {
    %c0_i32 = arith.constant 0 : i32
    %c0_i32_0 = arith.constant 0 : i32
    %c0_i32_1 = arith.constant 0 : i32
    return %c0_i32, %c0_i32_0 : i32, i32
  }
}

</mosaic_0001>

<llo_original>
// kernel: attention_with_survival_classifier.1
$region0: #{attention_with_survival_classifier.1}
  #allocation0 [shape = 'u32[]', space=smem, size = 0x4, offset = 0x4, fixed_abs, tag = 'smem constant byte address 0x4 - core index']
  #allocation1 [shape = 'u32[144,128]{1,0:T(1,128)}', space=vmem, size = 0x12000, scoped, tag = 'internal scratch']
  #allocation2 [shape = 'f32[1,1]{1,0:T(1,128)}', space=vmem, size = 0x200, scoped, tag = 'scratch operand']
  #allocation3 [shape = 'f32[1,1]{1,0:T(1,128)}', space=vmem, size = 0x200, scoped, tag = 'scratch operand']
  #allocation4 [shape = 'f32[1,1]{1,0:T(1,128)}', space=vmem, size = 0x200, scoped, tag = 'scratch operand']
  %s0 = inlined_call_operand.hbm [shape: f32[512,512], index: 0, kind: input, shape index: {}]
  %s1 = inlined_call_operand.hbm [shape: f32[512,256], index: 1, kind: input, shape index: {}]
  %s2 = inlined_call_operand.vmem [shape: f32[1,512], index: 2, kind: input, shape index: {}]
  %s3 = inlined_call_operand.vmem [shape: f32[1,128], index: 3, kind: input, shape index: {}]
  %s4 = inlined_call_operand.vmem [shape: f32[1,128], index: 4, kind: input, shape index: {}]
  %s5 = inlined_call_operand.vmem [shape: f32[1,128], index: 5, kind: input, shape index: {}]
  %s6 = inlined_call_operand.vmem [shape: f32[2], index: 6, kind: input, shape index: {}]
  %s7 = inlined_call_operand.hbm [shape: f32[1,1], index: 7, kind: output, shape index: {}]
  %s8 = sld [smem:[#allocation0]]
  $region81: #{attention_with_survival_classifier.1} parent=0
    _
  %s10 = ssub.s32 1, %s8
  %s11 = scalar_select 0, %s10, %s8
  $region1: #{attention_with_survival_classifier.1} parent=0
    #allocation5 [shape = 'u8[524288]{0}', space=vmem, size = 0x80000, scoped, tag = 'input window, operand 0']
    #allocation6 [shape = 's32[2]{0}', space=sflag, size = 0x8, scoped, tag = 'scoped memory for attention_with_survival_classifier.1']
    #allocation7 [shape = 's32[2]{0}', space=sflag, size = 0x8, scoped, tag = 'scoped memory for attention_with_survival_classifier.1']
    #allocation8 [shape = 's32[2]{0}', space=sflag, size = 0x8, scoped, tag = 'scoped memory for attention_with_survival_classifier.1']
    #allocation9 [shape = 'u8[524288]{0}', space=vmem, size = 0x80000, scoped, tag = 'input window, operand 1, single buffered']
    #allocation10 [shape = 's32[1]{0}', space=sflag, size = 0x4, scoped, tag = 'scoped memory for attention_with_survival_classifier.1']
    #allocation11 [shape = 'u8[512]{0}', space=smem, size = 0x200, scoped, tag = 'input window, operand 6, single buffered']
    #allocation12 [shape = 'u8[512]{0}', space=vmem, size = 0x400, scoped, tag = 'output window, operand 0, single buffered']
    %12 = vsyncpa [#allocation6], 0
    %s13 = scalar_lea.sflag [#allocation6], 1
    %14 = vsyncpa %s13, 0
    %15 = vsyncpa [#allocation10], 0
    %16 = vsyncpa [#allocation8], 0
    %17 = vsyncpa [#allocation7], 0
    loop: start=0, step=1, limit=6
    $region2: #{attention_with_survival_classifier.1} parent=1 // loop_pre_header
      _
    $region3: #{attention_with_survival_classifier.1} parent=1 // loop_header
      %s19 = sphi 0, %s23
      %p20 = scmp.ge.s32.totalorder %s19, 6
      %s29 = sphi 0, %s31
      %s32 = sphi 0, %s29
      %s33 = sphi 0, %s32
      %s49 = sphi 0, %s33
      %s53 = sphi 0, %s53
      %s55 = sphi 0, %s53
      %s56 = sphi 0, %s55
      %s70 = sphi 0, %s56
      %s74 = sphi 0, %s74
      %s76 = sphi 0, %s74
      %s77 = sphi 0, %s76
      %s91 = sphi 0, %s77
      %s95 = sphi 0, %s95
      %s97 = sphi 0, %s95
      %s98 = sphi 0, %s97
      %s112 = sphi 0, %s98
      %s116 = sphi 0, %s116
      %s118 = sphi 0, %s116
      %s119 = sphi 0, %s118
      %s133 = sphi 0, %s119
      %s137 = sphi 0, %s137
      %s139 = sphi 0, %s137
      %s140 = sphi 0, %s139
      %s154 = sphi 0, %s140
      %s158 = sphi 0, %s158
      %s160 = sphi 0, %s158
      %s161 = sphi 0, %s160
      %s175 = sphi 0, %s161
      %s179 = sphi 0, %s179
      %s181 = sphi 0, %s179
      %s182 = sphi 0, %s181
      %s196 = sphi 0, %s182
    $region4: #{attention_with_survival_classifier.1} parent=1 // loop_header_branch
      %22 = sbr.rel (%p20) target = $region8
    $region5: #{attention_with_survival_classifier.1} parent=1 // loop_body
      %s24 = ssub.s32 %s19, 1
      %s25 = ssub.s32 %s19, 2
      %s26 = sadd.s32 %s19, 1
      %s27 = ssub.s32 %s19, %s26
      %p28 = scmp.eq.s32.totalorder %s27, 0
      %s30 = sadd.s32 %s29, 1
      %s31 = scalar_select %p28, %s29, %s30
      %p34 = pneg %p28
      %p35 = scmp.eq.s32.totalorder %s19, 3
      %p36 = por %p34, %p35
      %p37 = scmp.ne.s32.totalorder %s29, %s32
      %p38 = scmp.eq.s32.totalorder %s19, 0
      %p39 = por %p37, %p38
      %p40 = scmp.ne.s32.totalorder %s29, %s32
      %p41 = scmp.eq.s32.totalorder %s24, 3
      %p42 = por %p40, %p41
      %p43 = scmp.ne.s32.totalorder %s32, %s33
      %p44 = scmp.eq.s32.totalorder %s24, 0
      %p45 = por %p43, %p44
      %p46 = scmp.ne.s32.totalorder %s32, %s33
      %p47 = scmp.eq.s32.totalorder %s25, 3
      %p48 = por %p46, %p47
      %p50 = scmp.ne.s32.totalorder %s33, %s49
      %p51 = scmp.eq.s32.totalorder %s25, 0
      %p52 = por %p50, %p51
      %s54 = sadd.s32 %s53, 1
      %p57 = scmp.eq.s32.totalorder %s19, 3
      %p58 = scmp.ne.s32.totalorder %s53, %s55
      %p59 = scmp.eq.s32.totalorder %s19, 0
      %p60 = por %p58, %p59
      %p61 = scmp.ne.s32.totalorder %s53, %s55
      %p62 = scmp.eq.s32.totalorder %s24, 3
      %p63 = por %p61, %p62
      %p64 = scmp.ne.s32.totalorder %s55, %s56
      %p65 = scmp.eq.s32.totalorder %s24, 0
      %p66 = por %p64, %p65
      %p67 = scmp.ne.s32.totalorder %s55, %s56
      %p68 = scmp.eq.s32.totalorder %s25, 3
      %p69 = por %p67, %p68
      %p71 = scmp.ne.s32.totalorder %s56, %s70
      %p72 = scmp.eq.s32.totalorder %s25, 0
      %p73 = por %p71, %p72
      %s75 = sadd.s32 %s74, 1
      %p78 = scmp.eq.s32.totalorder %s19, 3
      %p79 = scmp.ne.s32.totalorder %s74, %s76
      %p80 = scmp.eq.s32.totalorder %s19, 0
      %p81 = por %p79, %p80
      %p82 = scmp.ne.s32.totalorder %s74, %s76
      %p83 = scmp.eq.s32.totalorder %s24, 3
      %p84 = por %p82, %p83
      %p85 = scmp.ne.s32.totalorder %s76, %s77
      %p86 = scmp.eq.s32.totalorder %s24, 0
      %p87 = por %p85, %p86
      %p88 = scmp.ne.s32.totalorder %s76, %s77
      %p89 = scmp.eq.s32.totalorder %s25, 3
      %p90 = por %p88, %p89
      %p92 = scmp.ne.s32.totalorder %s77, %s91
      %p93 = scmp.eq.s32.totalorder %s25, 0
      %p94 = por %p92, %p93
      %s96 = sadd.s32 %s95, 1
      %p99 = scmp.eq.s32.totalorder %s19, 3
      %p100 = scmp.ne.s32.totalorder %s95, %s97
      %p101 = scmp.eq.s32.totalorder %s19, 0
      %p102 = por %p100, %p101
      %p103 = scmp.ne.s32.totalorder %s95, %s97
      %p104 = scmp.eq.s32.totalorder %s24, 3
      %p105 = por %p103, %p104
      %p106 = scmp.ne.s32.totalorder %s97, %s98
      %p107 = scmp.eq.s32.totalorder %s24, 0
      %p108 = por %p106, %p107
      %p109 = scmp.ne.s32.totalorder %s97, %s98
      %p110 = scmp.eq.s32.totalorder %s25, 3
      %p111 = por %p109, %p110
      %p113 = scmp.ne.s32.totalorder %s98, %s112
      %p114 = scmp.eq.s32.totalorder %s25, 0
      %p115 = por %p113, %p114
      %s117 = sadd.s32 %s116, 1
      %p120 = scmp.eq.s32.totalorder %s19, 3
      %p121 = scmp.ne.s32.totalorder %s116, %s118
      %p122 = scmp.eq.s32.totalorder %s19, 0
      %p123 = por %p121, %p122
      %p124 = scmp.ne.s32.totalorder %s116, %s118
      %p125 = scmp.eq.s32.totalorder %s24, 3
      %p126 = por %p124, %p125
      %p127 = scmp.ne.s32.totalorder %s118, %s119
      %p128 = scmp.eq.s32.totalorder %s24, 0
      %p129 = por %p127, %p128
      %p130 = scmp.ne.s32.totalorder %s118, %s119
      %p131 = scmp.eq.s32.totalorder %s25, 3
      %p132 = por %p130, %p131
      %p134 = scmp.ne.s32.totalorder %s119, %s133
      %p135 = scmp.eq.s32.totalorder %s25, 0
      %p136 = por %p134, %p135
      %s138 = sadd.s32 %s137, 1
      %p141 = scmp.eq.s32.totalorder %s19, 3
      %p142 = scmp.ne.s32.totalorder %s137, %s139
      %p143 = scmp.eq.s32.totalorder %s19, 0
      %p144 = por %p142, %p143
      %p145 = scmp.ne.s32.totalorder %s137, %s139
      %p146 = scmp.eq.s32.totalorder %s24, 3
      %p147 = por %p145, %p146
      %p148 = scmp.ne.s32.totalorder %s139, %s140
      %p149 = scmp.eq.s32.totalorder %s24, 0
      %p150 = por %p148, %p149
      %p151 = scmp.ne.s32.totalorder %s139, %s140
      %p152 = scmp.eq.s32.totalorder %s25, 3
      %p153 = por %p151, %p152
      %p155 = scmp.ne.s32.totalorder %s140, %s154
      %p156 = scmp.eq.s32.totalorder %s25, 0
      %p157 = por %p155, %p156
      %s159 = sadd.s32 %s158, 1
      %p162 = scmp.eq.s32.totalorder %s19, 3
      %p163 = scmp.ne.s32.totalorder %s158, %s160
      %p164 = scmp.eq.s32.totalorder %s19, 0
      %p165 = por %p163, %p164
      %p166 = scmp.ne.s32.totalorder %s158, %s160
      %p167 = scmp.eq.s32.totalorder %s24, 3
      %p168 = por %p166, %p167
      %p169 = scmp.ne.s32.totalorder %s160, %s161
      %p170 = scmp.eq.s32.totalorder %s24, 0
      %p171 = por %p169, %p170
      %p172 = scmp.ne.s32.totalorder %s160, %s161
      %p173 = scmp.eq.s32.totalorder %s25, 3
      %p174 = por %p172, %p173
      %p176 = scmp.ne.s32.totalorder %s161, %s175
      %p177 = scmp.eq.s32.totalorder %s25, 0
      %p178 = por %p176, %p177
      %s180 = sadd.s32 %s179, 1
      %p183 = scmp.eq.s32.totalorder %s19, 3
      %p184 = scmp.ne.s32.totalorder %s179, %s181
      %p185 = scmp.eq.s32.totalorder %s19, 0
      %p186 = por %p184, %p185
      %p187 = scmp.ne.s32.totalorder %s179, %s181
      %p188 = scmp.eq.s32.totalorder %s24, 3
      %p189 = por %p187, %p188
      %p190 = scmp.ne.s32.totalorder %s181, %s182
      %p191 = scmp.eq.s32.totalorder %s24, 0
      %p192 = por %p190, %p191
      %p193 = scmp.ne.s32.totalorder %s181, %s182
      %p194 = scmp.eq.s32.totalorder %s25, 3
      %p195 = por %p193, %p194
      %p197 = scmp.ne.s32.totalorder %s182, %s196
      %p198 = scmp.eq.s32.totalorder %s25, 0
      %p199 = por %p197, %p198
      %p200 = scmp.le.s32.totalorder 1, %s19
      %p201 = scmp.lt.s32.totalorder %s19, 5
      %p202 = pnand %p200, %p201
      %p203 = pneg %p202
      // Predicated region
      $region9: #{attention_with_survival_classifier.1} parent=5 // pred_check
        _
      $region10: #{attention_with_survival_classifier.1} parent=5 // pred_check_branch
        %205 = sbr.rel (%p202) target = $region12
      $region11: #{attention_with_survival_classifier.1} parent=5 // pred_region
        %s206 = ssub.s32 %s19, 1
        // Predicated region
        $region13: #{attention_with_survival_classifier.1} parent=11 // pred_check
          %p207 = pneg %p66
        $region14: #{attention_with_survival_classifier.1} parent=11 // pred_check_branch
          %209 = sbr.rel (%p207) target = $region16
        $region15: #{attention_with_survival_classifier.1} parent=11 // pred_region
          %s211 = ssub.s32 16384, 16384
          %212 = vsyncadd [#allocation10], %s211
          %s213 = sshll.u32 [#allocation9], 4
          %s214 = int_to_ptr.vmem [resolvable:$true] %s213
          %219 = dma.hbm_to_vmem [thread:$0]  %s1, 16384, %s214, [#allocation10], 256, 256, 16
        $region16: #{attention_with_survival_classifier.1} parent=11 // pred_fallthru
          _
        // Predicated region
        $region17: #{attention_with_survival_classifier.1} parent=11 // pred_check
          %p220 = pneg %p87
        $region18: #{attention_with_survival_classifier.1} parent=11 // pred_check_branch
          %222 = sbr.rel (%p220) target = $region20
        $region19: #{attention_with_survival_classifier.1} parent=11 // pred_region
          _
        $region20: #{attention_with_survival_classifier.1} parent=11 // pred_fallthru
          _
        // Predicated region
        $region21: #{attention_with_survival_classifier.1} parent=11 // pred_check
          %p223 = pneg %p108
        $region22: #{attention_with_survival_classifier.1} parent=11 // pred_check_branch
          %225 = sbr.rel (%p223) target = $region24
        $region23: #{attention_with_survival_classifier.1} parent=11 // pred_region
          _
        $region24: #{attention_with_survival_classifier.1} parent=11 // pred_fallthru
          _
        // Predicated region
        $region25: #{attention_with_survival_classifier.1} parent=11 // pred_check
          %p226 = pneg %p129
        $region26: #{attention_with_survival_classifier.1} parent=11 // pred_check_branch
          %228 = sbr.rel (%p226) target = $region28
        $region27: #{attention_with_survival_classifier.1} parent=11 // pred_region
          _
        $region28: #{attention_with_survival_classifier.1} parent=11 // pred_fallthru
          _
        // Predicated region
        $region29: #{attention_with_survival_classifier.1} parent=11 // pred_check
          %p229 = pneg %p150
        $region30: #{attention_with_survival_classifier.1} parent=11 // pred_check_branch
          %231 = sbr.rel (%p229) target = $region32
        $region31: #{attention_with_survival_classifier.1} parent=11 // pred_region
          _
        $region32: #{attention_with_survival_classifier.1} parent=11 // pred_fallthru
          _
        // Predicated region
        $region33: #{attention_with_survival_classifier.1} parent=11 // pred_check
          %p232 = pneg %p171
        $region34: #{attention_with_survival_classifier.1} parent=11 // pred_check_branch
          %234 = sbr.rel (%p232) target = $region36
        $region35: #{attention_with_survival_classifier.1} parent=11 // pred_region
          %s236 = ssub.s32 16, 16
          %237 = vsyncadd [#allocation8], %s236
          %s239 = sshll.u32 %s6, 4
          %s240 = int_to_ptr.vmem [resolvable:$true] %s239
          %242 = dma.vmem_to_smem %s240, 16, [#allocation11], [#allocation8]
        $region36: #{attention_with_survival_classifier.1} parent=11 // pred_fallthru
          _
      $region12: #{attention_with_survival_classifier.1} parent=5 // pred_fallthru
        _
      %p243 = scmp.lt.s32.totalorder %s19, 4
      // Predicated region
      $region37: #{attention_with_survival_classifier.1} parent=5 // pred_check
        %p244 = pneg %p243
      $region38: #{attention_with_survival_classifier.1} parent=5 // pred_check_branch
        %246 = sbr.rel (%p244) target = $region40
      $region39: #{attention_with_survival_classifier.1} parent=5 // pred_region
        // Predicated region
        $region41: #{attention_with_survival_classifier.1} parent=39 // pred_check
          %p247 = pneg %p39
        $region42: #{attention_with_survival_classifier.1} parent=39 // pred_check_branch
          %249 = sbr.rel (%p247) target = $region44
        $region43: #{attention_with_survival_classifier.1} parent=39 // pred_region
          %s250 = sand.u32 %s29, 1
          %s251 = scalar_lea.sflag [#allocation6], %s250
          %s252 = sand.u32 %s29, 1
          %s253 = smul.addr %s252, 512
          %s254 = scalar_lea.vmem [#allocation5], %s253
          %s255 = smul.u32 16, %s19
          %s257 = ssub.s32 8192, 8192
          %258 = vsyncadd %s251, %s257
          %s259 = smul.addr %s255, 4
          %s260 = smul.addr %s259, 128
          %s261 = scalar_lea.hbm %s0, %s260
          %s262 = sshll.u32 %s254, 4
          %s263 = int_to_ptr.vmem [resolvable:$true] %s262
          %268 = dma.hbm_to_vmem [thread:$0]  %s261, 8192, %s263, %s251, 512, 512, 32
        $region44: #{attention_with_survival_classifier.1} parent=39 // pred_fallthru
          _
      $region40: #{attention_with_survival_classifier.1} parent=5 // pred_fallthru
        _
      %p269 = scmp.le.s32.totalorder 1, %s19
      %p270 = scmp.lt.s32.totalorder %s19, 5
      %p271 = pnand %p269, %p270
      %p272 = pneg %p271
      // Predicated region
      $region45: #{attention_with_survival_classifier.1} parent=5 // pred_check
        _
      $region46: #{attention_with_survival_classifier.1} parent=5 // pred_check_branch
        %274 = sbr.rel (%p271) target = $region48
      $region47: #{attention_with_survival_classifier.1} parent=5 // pred_region
        %s275 = ssub.s32 %s19, 1
        %s276 = sand.u32 %s32, 1
        %s277 = scalar_lea.sflag [#allocation6], %s276
        %s278 = sand.u32 %s32, 1
        %s279 = smul.addr %s278, 512
        %s280 = scalar_lea.vmem [#allocation5], %s279
        // Predicated region
        $region49: #{attention_with_survival_classifier.1} parent=47 // pred_check
          %p281 = pneg %p45
        $region50: #{attention_with_survival_classifier.1} parent=47 // pred_check_branch
          %283 = sbr.rel (%p281) target = $region52
        $region51: #{attention_with_survival_classifier.1} parent=47 // pred_region
          %284 = dma.done %s277, 8192
        $region52: #{attention_with_survival_classifier.1} parent=47 // pred_fallthru
          _
        // Predicated region
        $region53: #{attention_with_survival_classifier.1} parent=47 // pred_check
          %p285 = pneg %p66
        $region54: #{attention_with_survival_classifier.1} parent=47 // pred_check_branch
          %287 = sbr.rel (%p285) target = $region56
        $region55: #{attention_with_survival_classifier.1} parent=47 // pred_region
          %288 = dma.done [#allocation10], 16384
        $region56: #{attention_with_survival_classifier.1} parent=47 // pred_fallthru
          _
        // Predicated region
        $region57: #{attention_with_survival_classifier.1} parent=47 // pred_check
          %p289 = pneg %p171
        $region58: #{attention_with_survival_classifier.1} parent=47 // pred_check_branch
          %291 = sbr.rel (%p289) target = $region60
        $region59: #{attention_with_survival_classifier.1} parent=47 // pred_region
          %292 = dma.done [#allocation8], 16
        $region60: #{attention_with_survival_classifier.1} parent=47 // pred_fallthru
          _
        %293 = sfence
        %s294 = sand.u32 %s32, 1
        %s295 = scalar_lea.sflag [#allocation6], %s294
        %s296 = sand.u32 %s32, 1
        %s297 = smul.addr %s296, 512
        %s298 = scalar_lea.vmem [#allocation5], %s297
        %p299 = pneg %p45
        %p300 = pneg %p42
        %p301 = pneg %p66
        %p302 = pneg %p63
        %p303 = pneg %p87
        %p304 = pneg %p84
        %p305 = pneg %p108
        %p306 = pneg %p105
        %p307 = pneg %p129
        %p308 = pneg %p126
        %p309 = pneg %p150
        %p310 = pneg %p147
        %p311 = pneg %p171
        %p312 = pneg %p168
        %p313 = pneg %p192
        %p314 = pneg %p189
        %s315 = smul.u32 16, %s24
        %p316 = scmp.eq.s32.totalorder %s24, 0
        // Predicated region
        $region61: #{attention_with_survival_classifier.1} parent=47 // pred_check
          %p317 = pneg %p316
        $region62: #{attention_with_survival_classifier.1} parent=47 // pred_check_branch
          %319 = sbr.rel (%p317) target = $region64
        $region63: #{attention_with_survival_classifier.1} parent=47 // pred_region
          %vm320 = vcmask 0
          %321 = vst.msk [vmem:[#allocation2] sm:$0x1] %vm320, -inf
          %322 = vst.msk [vmem:[#allocation3] sm:$0x1] %vm320, 0.0
          %323 = vst.msk [vmem:[#allocation4] sm:$0x1] %vm320, 0.0
        $region64: #{attention_with_survival_classifier.1} parent=47 // pred_fallthru
          _
        %v324 = vld [vmem:[%s280] sm:$0xff]
        %v325 = vld [vmem:[%s280 + $0x8] sm:$0xff]
        %v326 = vld [vmem:[%s280 + $0x10] sm:$0xff]
        %v327 = vld [vmem:[%s280 + $0x18] sm:$0xff]
        %v328 = vld [vmem:[%s280 + $0x20] sm:$0xff]
        %v329 = vld [vmem:[%s280 + $0x28] sm:$0xff]
        %v330 = vld [vmem:[%s280 + $0x30] sm:$0xff]
        %v331 = vld [vmem:[%s280 + $0x38] sm:$0xff]
        %v332 = vld [vmem:[%s280 + $0x40] sm:$0xff]
        %v333 = vld [vmem:[%s280 + $0x48] sm:$0xff]
        %v334 = vld [vmem:[%s280 + $0x50] sm:$0xff]
        %v335 = vld [vmem:[%s280 + $0x58] sm:$0xff]
        %v336 = vld [vmem:[%s280 + $0x60] sm:$0xff]
        %v337 = vld [vmem:[%s280 + $0x68] sm:$0xff]
        %v338 = vld [vmem:[%s280 + $0x70] sm:$0xff]
        %v339 = vld [vmem:[%s280 + $0x78] sm:$0xff]
        %v340 = vld [vmem:[%s280 + $0x80] sm:$0xff]
        %v341 = vld [vmem:[%s280 + $0x88] sm:$0xff]
        %v342 = vld [vmem:[%s280 + $0x90] sm:$0xff]
        %v343 = vld [vmem:[%s280 + $0x98] sm:$0xff]
        %v344 = vld [vmem:[%s280 + $0xa0] sm:$0xff]
        %v345 = vld [vmem:[%s280 + $0xa8] sm:$0xff]
        %v346 = vld [vmem:[%s280 + $0xb0] sm:$0xff]
        %v347 = vld [vmem:[%s280 + $0xb8] sm:$0xff]
        %v348 = vld [vmem:[%s280 + $0xc0] sm:$0xff]
        %v349 = vld [vmem:[%s280 + $0xc8] sm:$0xff]
        %v350 = vld [vmem:[%s280 + $0xd0] sm:$0xff]
        %v351 = vld [vmem:[%s280 + $0xd8] sm:$0xff]
        %v352 = vld [vmem:[%s280 + $0xe0] sm:$0xff]
        %v353 = vld [vmem:[%s280 + $0xe8] sm:$0xff]
        %v354 = vld [vmem:[%s280 + $0xf0] sm:$0xff]
        %v355 = vld [vmem:[%s280 + $0xf8] sm:$0xff]
        %v356 = vld [vmem:[%s280 + $0x100] sm:$0xff]
        %v357 = vld [vmem:[%s280 + $0x108] sm:$0xff]
        %v358 = vld [vmem:[%s280 + $0x110] sm:$0xff]
        %v359 = vld [vmem:[%s280 + $0x118] sm:$0xff]
        %v360 = vld [vmem:[%s280 + $0x120] sm:$0xff]
        %v361 = vld [vmem:[%s280 + $0x128] sm:$0xff]
        %v362 = vld [vmem:[%s280 + $0x130] sm:$0xff]
        %v363 = vld [vmem:[%s280 + $0x138] sm:$0xff]
        %v364 = vld [vmem:[%s280 + $0x140] sm:$0xff]
        %v365 = vld [vmem:[%s280 + $0x148] sm:$0xff]
        %v366 = vld [vmem:[%s280 + $0x150] sm:$0xff]
        %v367 = vld [vmem:[%s280 + $0x158] sm:$0xff]
        %v368 = vld [vmem:[%s280 + $0x160] sm:$0xff]
        %v369 = vld [vmem:[%s280 + $0x168] sm:$0xff]
        %v370 = vld [vmem:[%s280 + $0x170] sm:$0xff]
        %v371 = vld [vmem:[%s280 + $0x178] sm:$0xff]
        %v372 = vld [vmem:[%s280 + $0x180] sm:$0xff]
        %v373 = vld [vmem:[%s280 + $0x188] sm:$0xff]
        %v374 = vld [vmem:[%s280 + $0x190] sm:$0xff]
        %v375 = vld [vmem:[%s280 + $0x198] sm:$0xff]
        %v376 = vld [vmem:[%s280 + $0x1a0] sm:$0xff]
        %v377 = vld [vmem:[%s280 + $0x1a8] sm:$0xff]
        %v378 = vld [vmem:[%s280 + $0x1b0] sm:$0xff]
        %v379 = vld [vmem:[%s280 + $0x1b8] sm:$0xff]
        %v380 = vld [vmem:[%s280 + $0x1c0] sm:$0xff]
        %v381 = vld [vmem:[%s280 + $0x1c8] sm:$0xff]
        %v382 = vld [vmem:[%s280 + $0x1d0] sm:$0xff]
        %v383 = vld [vmem:[%s280 + $0x1d8] sm:$0xff]
        %v384 = vld [vmem:[%s280 + $0x1e0] sm:$0xff]
        %v385 = vld [vmem:[%s280 + $0x1e8] sm:$0xff]
        %v386 = vld [vmem:[%s280 + $0x1f0] sm:$0xff]
        %v387 = vld [vmem:[%s280 + $0x1f8] sm:$0xff]
        %v388 = vld [vmem:[#allocation9] sm:$0xff]
        %v389 = vld [vmem:[#allocation9 + $0x8] sm:$0xff]
        %v390 = vld [vmem:[#allocation9 + $0x10] sm:$0xff]
        %v391 = vld [vmem:[#allocation9 + $0x18] sm:$0xff]
        %v392 = vld [vmem:[#allocation9 + $0x20] sm:$0xff]
        %v393 = vld [vmem:[#allocation9 + $0x28] sm:$0xff]
        %v394 = vld [vmem:[#allocation9 + $0x30] sm:$0xff]
        %v395 = vld [vmem:[#allocation9 + $0x38] sm:$0xff]
        %v396 = vld [vmem:[#allocation9 + $0x40] sm:$0xff]
        %v397 = vld [vmem:[#allocation9 + $0x48] sm:$0xff]
        %v398 = vld [vmem:[#allocation9 + $0x50] sm:$0xff]
        %v399 = vld [vmem:[#allocation9 + $0x58] sm:$0xff]
        %v400 = vld [vmem:[#allocation9 + $0x60] sm:$0xff]
        %v401 = vld [vmem:[#allocation9 + $0x68] sm:$0xff]
        %v402 = vld [vmem:[#allocation9 + $0x70] sm:$0xff]
        %v403 = vld [vmem:[#allocation9 + $0x78] sm:$0xff]
        %v404 = vld [vmem:[#allocation9 + $0x80] sm:$0xff]
        %v405 = vld [vmem:[#allocation9 + $0x88] sm:$0xff]
        %v406 = vld [vmem:[#allocation9 + $0x90] sm:$0xff]
        %v407 = vld [vmem:[#allocation9 + $0x98] sm:$0xff]
        %v408 = vld [vmem:[#allocation9 + $0xa0] sm:$0xff]
        %v409 = vld [vmem:[#allocation9 + $0xa8] sm:$0xff]
        %v410 = vld [vmem:[#allocation9 + $0xb0] sm:$0xff]
        %v411 = vld [vmem:[#allocation9 + $0xb8] sm:$0xff]
        %v412 = vld [vmem:[#allocation9 + $0xc0] sm:$0xff]
        %v413 = vld [vmem:[#allocation9 + $0xc8] sm:$0xff]
        %v414 = vld [vmem:[#allocation9 + $0xd0] sm:$0xff]
        %v415 = vld [vmem:[#allocation9 + $0xd8] sm:$0xff]
        %v416 = vld [vmem:[#allocation9 + $0xe0] sm:$0xff]
        %v417 = vld [vmem:[#allocation9 + $0xe8] sm:$0xff]
        %v418 = vld [vmem:[#allocation9 + $0xf0] sm:$0xff]
        %v419 = vld [vmem:[#allocation9 + $0xf8] sm:$0xff]
        %v420 = vld [vmem:[#allocation9 + $0x100] sm:$0xff]
        %v421 = vld [vmem:[#allocation9 + $0x108] sm:$0xff]
        %v422 = vld [vmem:[#allocation9 + $0x110] sm:$0xff]
        %v423 = vld [vmem:[#allocation9 + $0x118] sm:$0xff]
        %v424 = vld [vmem:[#allocation9 + $0x120] sm:$0xff]
        %v425 = vld [vmem:[#allocation9 + $0x128] sm:$0xff]
        %v426 = vld [vmem:[#allocation9 + $0x130] sm:$0xff]
        %v427 = vld [vmem:[#allocation9 + $0x138] sm:$0xff]
        %v428 = vld [vmem:[#allocation9 + $0x140] sm:$0xff]
        %v429 = vld [vmem:[#allocation9 + $0x148] sm:$0xff]
        %v430 = vld [vmem:[#allocation9 + $0x150] sm:$0xff]
        %v431 = vld [vmem:[#allocation9 + $0x158] sm:$0xff]
        %v432 = vld [vmem:[#allocation9 + $0x160] sm:$0xff]
        %v433 = vld [vmem:[#allocation9 + $0x168] sm:$0xff]
        %v434 = vld [vmem:[#allocation9 + $0x170] sm:$0xff]
        %v435 = vld [vmem:[#allocation9 + $0x178] sm:$0xff]
        %v436 = vld [vmem:[#allocation9 + $0x180] sm:$0xff]
        %v437 = vld [vmem:[#allocation9 + $0x188] sm:$0xff]
        %v438 = vld [vmem:[#allocation9 + $0x190] sm:$0xff]
        %v439 = vld [vmem:[#allocation9 + $0x198] sm:$0xff]
        %v440 = vld [vmem:[#allocation9 + $0x1a0] sm:$0xff]
        %v441 = vld [vmem:[#allocation9 + $0x1a8] sm:$0xff]
        %v442 = vld [vmem:[#allocation9 + $0x1b0] sm:$0xff]
        %v443 = vld [vmem:[#allocation9 + $0x1b8] sm:$0xff]
        %v444 = vld [vmem:[#allocation9 + $0x1c0] sm:$0xff]
        %v445 = vld [vmem:[#allocation9 + $0x1c8] sm:$0xff]
        %v446 = vld [vmem:[#allocation9 + $0x1d0] sm:$0xff]
        %v447 = vld [vmem:[#allocation9 + $0x1d8] sm:$0xff]
        %v448 = vld [vmem:[#allocation9 + $0x1e0] sm:$0xff]
        %v449 = vld [vmem:[#allocation9 + $0x1e8] sm:$0xff]
        %v450 = vld [vmem:[#allocation9 + $0x1f0] sm:$0xff]
        %v451 = vld [vmem:[#allocation9 + $0x1f8] sm:$0xff]
        %v452 = vld [vmem:[#allocation9 + $0x200] sm:$0xff]
        %v453 = vld [vmem:[#allocation9 + $0x208] sm:$0xff]
        %v454 = vld [vmem:[#allocation9 + $0x210] sm:$0xff]
        %v455 = vld [vmem:[#allocation9 + $0x218] sm:$0xff]
        %v456 = vld [vmem:[#allocation9 + $0x220] sm:$0xff]
        %v457 = vld [vmem:[#allocation9 + $0x228] sm:$0xff]
        %v458 = vld [vmem:[#allocation9 + $0x230] sm:$0xff]
        %v459 = vld [vmem:[#allocation9 + $0x238] sm:$0xff]
        %v460 = vld [vmem:[#allocation9 + $0x240] sm:$0xff]
        %v461 = vld [vmem:[#allocation9 + $0x248] sm:$0xff]
        %v462 = vld [vmem:[#allocation9 + $0x250] sm:$0xff]
        %v463 = vld [vmem:[#allocation9 + $0x258] sm:$0xff]
        %v464 = vld [vmem:[#allocation9 + $0x260] sm:$0xff]
        %v465 = vld [vmem:[#allocation9 + $0x268] sm:$0xff]
        %v466 = vld [vmem:[#allocation9 + $0x270] sm:$0xff]
        %v467 = vld [vmem:[#allocation9 + $0x278] sm:$0xff]
        %v468 = vld [vmem:[#allocation9 + $0x280] sm:$0xff]
        %v469 = vld [vmem:[#allocation9 + $0x288] sm:$0xff]
        %v470 = vld [vmem:[#allocation9 + $0x290] sm:$0xff]
        %v471 = vld [vmem:[#allocation9 + $0x298] sm:$0xff]
        %v472 = vld [vmem:[#allocation9 + $0x2a0] sm:$0xff]
        %v473 = vld [vmem:[#allocation9 + $0x2a8] sm:$0xff]
        %v474 = vld [vmem:[#allocation9 + $0x2b0] sm:$0xff]
        %v475 = vld [vmem:[#allocation9 + $0x2b8] sm:$0xff]
        %v476 = vld [vmem:[#allocation9 + $0x2c0] sm:$0xff]
        %v477 = vld [vmem:[#allocation9 + $0x2c8] sm:$0xff]
        %v478 = vld [vmem:[#allocation9 + $0x2d0] sm:$0xff]
        %v479 = vld [vmem:[#allocation9 + $0x2d8] sm:$0xff]
        %v480 = vld [vmem:[#allocation9 + $0x2e0] sm:$0xff]
        %v481 = vld [vmem:[#allocation9 + $0x2e8] sm:$0xff]
        %v482 = vld [vmem:[#allocation9 + $0x2f0] sm:$0xff]
        %v483 = vld [vmem:[#allocation9 + $0x2f8] sm:$0xff]
        %v484 = vld [vmem:[#allocation9 + $0x300] sm:$0xff]
        %v485 = vld [vmem:[#allocation9 + $0x308] sm:$0xff]
        %v486 = vld [vmem:[#allocation9 + $0x310] sm:$0xff]
        %v487 = vld [vmem:[#allocation9 + $0x318] sm:$0xff]
        %v488 = vld [vmem:[#allocation9 + $0x320] sm:$0xff]
        %v489 = vld [vmem:[#allocation9 + $0x328] sm:$0xff]
        %v490 = vld [vmem:[#allocation9 + $0x330] sm:$0xff]
        %v491 = vld [vmem:[#allocation9 + $0x338] sm:$0xff]
        %v492 = vld [vmem:[#allocation9 + $0x340] sm:$0xff]
        %v493 = vld [vmem:[#allocation9 + $0x348] sm:$0xff]
        %v494 = vld [vmem:[#allocation9 + $0x350] sm:$0xff]
        %v495 = vld [vmem:[#allocation9 + $0x358] sm:$0xff]
        %v496 = vld [vmem:[#allocation9 + $0x360] sm:$0xff]
        %v497 = vld [vmem:[#allocation9 + $0x368] sm:$0xff]
        %v498 = vld [vmem:[#allocation9 + $0x370] sm:$0xff]
        %v499 = vld [vmem:[#allocation9 + $0x378] sm:$0xff]
        %v500 = vld [vmem:[#allocation9 + $0x380] sm:$0xff]
        %v501 = vld [vmem:[#allocation9 + $0x388] sm:$0xff]
        %v502 = vld [vmem:[#allocation9 + $0x390] sm:$0xff]
        %v503 = vld [vmem:[#allocation9 + $0x398] sm:$0xff]
        %v504 = vld [vmem:[#allocation9 + $0x3a0] sm:$0xff]
        %v505 = vld [vmem:[#allocation9 + $0x3a8] sm:$0xff]
        %v506 = vld [vmem:[#allocation9 + $0x3b0] sm:$0xff]
        %v507 = vld [vmem:[#allocation9 + $0x3b8] sm:$0xff]
        %v508 = vld [vmem:[#allocation9 + $0x3c0] sm:$0xff]
        %v509 = vld [vmem:[#allocation9 + $0x3c8] sm:$0xff]
        %v510 = vld [vmem:[#allocation9 + $0x3d0] sm:$0xff]
        %v511 = vld [vmem:[#allocation9 + $0x3d8] sm:$0xff]
        %v512 = vld [vmem:[#allocation9 + $0x3e0] sm:$0xff]
        %v513 = vld [vmem:[#allocation9 + $0x3e8] sm:$0xff]
        %v514 = vld [vmem:[#allocation9 + $0x3f0] sm:$0xff]
        %v515 = vld [vmem:[#allocation9 + $0x3f8] sm:$0xff]
        %516 = vmatprep.subr.mxu0 %v389
        %517 = vmatpush1.msra.mxu0 %v388
        %518 = vmatprep.subr.mxu0 %v391
        %519 = vmatpush1.msra.mxu0 %v390
        %520 = vmatprep.subr.mxu0 %v393
        %521 = vmatpush1.msra.mxu0 %v392
        %522 = vmatprep.subr.mxu0 %v395
        %523 = vmatpush1.msra.mxu0 %v394
        %524 = vmatprep.subr.mxu0 %v397
        %525 = vmatpush1.msra.mxu0 %v396
        %526 = vmatprep.subr.mxu0 %v399
        %527 = vmatpush1.msra.mxu0 %v398
        %528 = vmatprep.subr.mxu0 %v401
        %529 = vmatpush1.msra.mxu0 %v400
        %530 = vmatprep.subr.mxu0 %v403
        %531 = vmatpush1.msra.mxu0 %v402
        %532 = vmatprep.subr.mxu0 %v405
        %533 = vmatpush1.msra.mxu0 %v404
        %534 = vmatprep.subr.mxu0 %v407
        %535 = vmatpush1.msra.mxu0 %v406
        %536 = vmatprep.subr.mxu0 %v409
        %537 = vmatpush1.msra.mxu0 %v408
        %538 = vmatprep.subr.mxu0 %v411
        %539 = vmatpush1.msra.mxu0 %v410
        %540 = vmatprep.subr.mxu0 %v413
        %541 = vmatpush1.msra.mxu0 %v412
        %542 = vmatprep.subr.mxu0 %v415
        %543 = vmatpush1.msra.mxu0 %v414
        %544 = vmatprep.subr.mxu0 %v417
        %545 = vmatpush1.msra.mxu0 %v416
        %546 = vmatprep.subr.mxu0 %v419
        %547 = vmatpush1.msra.mxu0 %v418
        %548 = vmatprep.subr.mxu0 %v421
        %549 = vmatpush1.msra.mxu0 %v420
        %550 = vmatprep.subr.mxu0 %v423
        %551 = vmatpush1.msra.mxu0 %v422
        %552 = vmatprep.subr.mxu0 %v425
        %553 = vmatpush1.msra.mxu0 %v424
        %554 = vmatprep.subr.mxu0 %v427
        %555 = vmatpush1.msra.mxu0 %v426
        %556 = vmatprep.subr.mxu0 %v429
        %557 = vmatpush1.msra.mxu0 %v428
        %558 = vmatprep.subr.mxu0 %v431
        %559 = vmatpush1.msra.mxu0 %v430
        %560 = vmatprep.subr.mxu0 %v433
        %561 = vmatpush1.msra.mxu0 %v432
        %562 = vmatprep.subr.mxu0 %v435
        %563 = vmatpush1.msra.mxu0 %v434
        %564 = vmatprep.subr.mxu0 %v437
        %565 = vmatpush1.msra.mxu0 %v436
        %566 = vmatprep.subr.mxu0 %v439
        %567 = vmatpush1.msra.mxu0 %v438
        %568 = vmatprep.subr.mxu0 %v441
        %569 = vmatpush1.msra.mxu0 %v440
        %570 = vmatprep.subr.mxu0 %v443
        %571 = vmatpush1.msra.mxu0 %v442
        %572 = vmatprep.subr.mxu0 %v445
        %573 = vmatpush1.msra.mxu0 %v444
        %574 = vmatprep.subr.mxu0 %v447
        %575 = vmatpush1.msra.mxu0 %v446
        %576 = vmatprep.subr.mxu0 %v449
        %577 = vmatpush1.msra.mxu0 %v448
        %578 = vmatprep.subr.mxu0 %v451
        %579 = vmatpush1.msra.mxu0 %v450
        %580 = vmatprep.mubr.f32.mxu0 %v325
        %581 = vmatmul.mubr.f32.gmra.mrb[0].mxu0 %v324
        %v582 = vpop.f32.mrb[0].mxu0
        %v583 = vadd.f32 0.0, %v582
        %v584 = vpop.f32.mrb[0].mxu0
        %v585 = vadd.f32 0.0, %v584
        %586 = vmatprep.mubr.f32.mxu0 %v329
        %587 = vmatmul.mubr.f32.gmra.mrb[0].mxu0 %v328
        %v588 = vpop.f32.mrb[0].mxu0
        %v589 = vadd.f32 0.0, %v588
        %v590 = vpop.f32.mrb[0].mxu0
        %v591 = vadd.f32 0.0, %v590
        %592 = vmatprep.mubr.f32.mxu0 %v333
        %593 = vmatmul.mubr.f32.gmra.mrb[0].mxu0 %v332
        %v594 = vpop.f32.mrb[0].mxu0
        %v595 = vadd.f32 0.0, %v594
        %v596 = vpop.f32.mrb[0].mxu0
        %v597 = vadd.f32 0.0, %v596
        %598 = vmatprep.mubr.f32.mxu0 %v337
        %599 = vmatmul.mubr.f32.gmra.mrb[0].mxu0 %v336
        %v600 = vpop.f32.mrb[0].mxu0
        %v601 = vadd.f32 0.0, %v600
        %v602 = vpop.f32.mrb[0].mxu0
        %v603 = vadd.f32 0.0, %v602
        %604 = vmatprep.mubr.f32.mxu0 %v341
        %605 = vmatmul.mubr.f32.gmra.mrb[0].mxu0 %v340
        %v606 = vpop.f32.mrb[0].mxu0
        %v607 = vadd.f32 0.0, %v606
        %v608 = vpop.f32.mrb[0].mxu0
        %v609 = vadd.f32 0.0, %v608
        %610 = vmatprep.mubr.f32.mxu0 %v345
        %611 = vmatmul.mubr.f32.gmra.mrb[0].mxu0 %v344
        %v612 = vpop.f32.mrb[0].mxu0
        %v613 = vadd.f32 0.0, %v612
        %v614 = vpop.f32.mrb[0].mxu0
        %v615 = vadd.f32 0.0, %v614
        %616 = vmatprep.mubr.f32.mxu0 %v349
        %617 = vmatmul.mubr.f32.gmra.mrb[0].mxu0 %v348
        %v618 = vpop.f32.mrb[0].mxu0
        %v619 = vadd.f32 0.0, %v618
        %v620 = vpop.f32.mrb[0].mxu0
        %v621 = vadd.f32 0.0, %v620
        %622 = vmatprep.mubr.f32.mxu0 %v353
        %623 = vmatmul.mubr.f32.gmra.mrb[0].mxu0 %v352
        %v624 = vpop.f32.mrb[0].mxu0
        %v625 = vadd.f32 0.0, %v624
        %v626 = vpop.f32.mrb[0].mxu0
        %v627 = vadd.f32 0.0, %v626
        %628 = vmatprep.mubr.f32.mxu0 %v357
        %629 = vmatmul.mubr.f32.gmra.mrb[0].mxu0 %v356
        %v630 = vpop.f32.mrb[0].mxu0
        %v631 = vadd.f32 0.0, %v630
        %v632 = vpop.f32.mrb[0].mxu0
        %v633 = vadd.f32 0.0, %v632
        %634 = vmatprep.mubr.f32.mxu0 %v361
        %635 = vmatmul.mubr.f32.gmra.mrb[0].mxu0 %v360
        %v636 = vpop.f32.mrb[0].mxu0
        %v637 = vadd.f32 0.0, %v636
        %v638 = vpop.f32.mrb[0].mxu0
        %v639 = vadd.f32 0.0, %v638
        %640 = vmatprep.mubr.f32.mxu0 %v365
        %641 = vmatmul.mubr.f32.gmra.mrb[0].mxu0 %v364
        %v642 = vpop.f32.mrb[0].mxu0
        %v643 = vadd.f32 0.0, %v642
        %v644 = vpop.f32.mrb[0].mxu0
        %v645 = vadd.f32 0.0, %v644
        %646 = vmatprep.mubr.f32.mxu0 %v369
        %647 = vmatmul.mubr.f32.gmra.mrb[0].mxu0 %v368
        %v648 = vpop.f32.mrb[0].mxu0
        %v649 = vadd.f32 0.0, %v648
        %v650 = vpop.f32.mrb[0].mxu0
        %v651 = vadd.f32 0.0, %v650
        %652 = vmatprep.mubr.f32.mxu0 %v373
        %653 = vmatmul.mubr.f32.gmra.mrb[0].mxu0 %v372
        %v654 = vpop.f32.mrb[0].mxu0
        %v655 = vadd.f32 0.0, %v654
        %v656 = vpop.f32.mrb[0].mxu0
        %v657 = vadd.f32 0.0, %v656
        %658 = vmatprep.mubr.f32.mxu0 %v377
        %659 = vmatmul.mubr.f32.gmra.mrb[0].mxu0 %v376
        %v660 = vpop.f32.mrb[0].mxu0
        %v661 = vadd.f32 0.0, %v660
        %v662 = vpop.f32.mrb[0].mxu0
        %v663 = vadd.f32 0.0, %v662
        %664 = vmatprep.mubr.f32.mxu0 %v381
        %665 = vmatmul.mubr.f32.gmra.mrb[0].mxu0 %v380
        %v666 = vpop.f32.mrb[0].mxu0
        %v667 = vadd.f32 0.0, %v666
        %v668 = vpop.f32.mrb[0].mxu0
        %v669 = vadd.f32 0.0, %v668
        %670 = vmatprep.mubr.f32.mxu0 %v385
        %671 = vmatmul.mubr.f32.gmra.mrb[0].mxu0 %v384
        %v672 = vpop.f32.mrb[0].mxu0
        %v673 = vadd.f32 0.0, %v672
        %v674 = vpop.f32.mrb[0].mxu0
        %v675 = vadd.f32 0.0, %v674
        %676 = vdwg.mxu0
        %677 = vmatprep.subr.mxu0 %v453
        %678 = vmatpush1.msra.mxu0 %v452
        %679 = vmatprep.subr.mxu0 %v455
        %680 = vmatpush1.msra.mxu0 %v454
        %681 = vmatprep.subr.mxu0 %v457
        %682 = vmatpush1.msra.mxu0 %v456
        %683 = vmatprep.subr.mxu0 %v459
        %684 = vmatpush1.msra.mxu0 %v458
        %685 = vmatprep.subr.mxu0 %v461
        %686 = vmatpush1.msra.mxu0 %v460
        %687 = vmatprep.subr.mxu0 %v463
        %688 = vmatpush1.msra.mxu0 %v462
        %689 = vmatprep.subr.mxu0 %v465
        %690 = vmatpush1.msra.mxu0 %v464
        %691 = vmatprep.subr.mxu0 %v467
        %692 = vmatpush1.msra.mxu0 %v466
        %693 = vmatprep.subr.mxu0 %v469
        %694 = vmatpush1.msra.mxu0 %v468
        %695 = vmatprep.subr.mxu0 %v471
        %696 = vmatpush1.msra.mxu0 %v470
        %697 = vmatprep.subr.mxu0 %v473
        %698 = vmatpush1.msra.mxu0 %v472
        %699 = vmatprep.subr.mxu0 %v475
        %700 = vmatpush1.msra.mxu0 %v474
        %701 = vmatprep.subr.mxu0 %v477
        %702 = vmatpush1.msra.mxu0 %v476
        %703 = vmatprep.subr.mxu0 %v479
        %704 = vmatpush1.msra.mxu0 %v478
        %705 = vmatprep.subr.mxu0 %v481
        %706 = vmatpush1.msra.mxu0 %v480
        %707 = vmatprep.subr.mxu0 %v483
        %708 = vmatpush1.msra.mxu0 %v482
        %709 = vmatprep.subr.mxu0 %v485
        %710 = vmatpush1.msra.mxu0 %v484
        %711 = vmatprep.subr.mxu0 %v487
        %712 = vmatpush1.msra.mxu0 %v486
        %713 = vmatprep.subr.mxu0 %v489
        %714 = vmatpush1.msra.mxu0 %v488
        %715 = vmatprep.subr.mxu0 %v491
        %716 = vmatpush1.msra.mxu0 %v490
        %717 = vmatprep.subr.mxu0 %v493
        %718 = vmatpush1.msra.mxu0 %v492
        %719 = vmatprep.subr.mxu0 %v495
        %720 = vmatpush1.msra.mxu0 %v494
        %721 = vmatprep.subr.mxu0 %v497
        %722 = vmatpush1.msra.mxu0 %v496
        %723 = vmatprep.subr.mxu0 %v499
        %724 = vmatpush1.msra.mxu0 %v498
        %725 = vmatprep.subr.mxu0 %v501
        %726 = vmatpush1.msra.mxu0 %v500
        %727 = vmatprep.subr.mxu0 %v503
        %728 = vmatpush1.msra.mxu0 %v502
        %729 = vmatprep.subr.mxu0 %v505
        %730 = vmatpush1.msra.mxu0 %v504
        %731 = vmatprep.subr.mxu0 %v507
        %732 = vmatpush1.msra.mxu0 %v506
        %733 = vmatprep.subr.mxu0 %v509
        %734 = vmatpush1.msra.mxu0 %v508
        %735 = vmatprep.subr.mxu0 %v511
        %736 = vmatpush1.msra.mxu0 %v510
        %737 = vmatprep.subr.mxu0 %v513
        %738 = vmatpush1.msra.mxu0 %v512
        %739 = vmatprep.subr.mxu0 %v515
        %740 = vmatpush1.msra.mxu0 %v514
        %741 = vmatprep.mubr.f32.mxu0 %v327
        %742 = vmatmul.mubr.f32.gmra.mrb[0].mxu0 %v326
        %v743 = vpop.f32.mrb[0].mxu0
        %v744 = vadd.f32 %v583, %v743
        %v745 = vpop.f32.mrb[0].mxu0
        %v746 = vadd.f32 %v585, %v745
        %747 = vmatprep.mubr.f32.mxu0 %v331
        %748 = vmatmul.mubr.f32.gmra.mrb[0].mxu0 %v330
        %v749 = vpop.f32.mrb[0].mxu0
        %v750 = vadd.f32 %v589, %v749
        %v751 = vpop.f32.mrb[0].mxu0
        %v752 = vadd.f32 %v591, %v751
        %753 = vmatprep.mubr.f32.mxu0 %v335
        %754 = vmatmul.mubr.f32.gmra.mrb[0].mxu0 %v334
        %v755 = vpop.f32.mrb[0].mxu0
        %v756 = vadd.f32 %v595, %v755
        %v757 = vpop.f32.mrb[0].mxu0
        %v758 = vadd.f32 %v597, %v757
        %759 = vmatprep.mubr.f32.mxu0 %v339
        %760 = vmatmul.mubr.f32.gmra.mrb[0].mxu0 %v338
        %v761 = vpop.f32.mrb[0].mxu0
        %v762 = vadd.f32 %v601, %v761
        %v763 = vpop.f32.mrb[0].mxu0
        %v764 = vadd.f32 %v603, %v763
        %765 = vmatprep.mubr.f32.mxu0 %v343
        %766 = vmatmul.mubr.f32.gmra.mrb[0].mxu0 %v342
        %v767 = vpop.f32.mrb[0].mxu0
        %v768 = vadd.f32 %v607, %v767
        %v769 = vpop.f32.mrb[0].mxu0
        %v770 = vadd.f32 %v609, %v769
        %771 = vmatprep.mubr.f32.mxu0 %v347
        %772 = vmatmul.mubr.f32.gmra.mrb[0].mxu0 %v346
        %v773 = vpop.f32.mrb[0].mxu0
        %v774 = vadd.f32 %v613, %v773
        %v775 = vpop.f32.mrb[0].mxu0
        %v776 = vadd.f32 %v615, %v775
        %777 = vmatprep.mubr.f32.mxu0 %v351
        %778 = vmatmul.mubr.f32.gmra.mrb[0].mxu0 %v350
        %v779 = vpop.f32.mrb[0].mxu0
        %v780 = vadd.f32 %v619, %v779
        %v781 = vpop.f32.mrb[0].mxu0
        %v782 = vadd.f32 %v621, %v781
        %783 = vmatprep.mubr.f32.mxu0 %v355
        %784 = vmatmul.mubr.f32.gmra.mrb[0].mxu0 %v354
        %v785 = vpop.f32.mrb[0].mxu0
        %v786 = vadd.f32 %v625, %v785
        %v787 = vpop.f32.mrb[0].mxu0
        %v788 = vadd.f32 %v627, %v787
        %789 = vmatprep.mubr.f32.mxu0 %v359
        %790 = vmatmul.mubr.f32.gmra.mrb[0].mxu0 %v358
        %v791 = vpop.f32.mrb[0].mxu0
        %v792 = vadd.f32 %v631, %v791
        %v793 = vpop.f32.mrb[0].mxu0
        %v794 = vadd.f32 %v633, %v793
        %795 = vmatprep.mubr.f32.mxu0 %v363
        %796 = vmatmul.mubr.f32.gmra.mrb[0].mxu0 %v362
        %v797 = vpop.f32.mrb[0].mxu0
        %v798 = vadd.f32 %v637, %v797
        %v799 = vpop.f32.mrb[0].mxu0
        %v800 = vadd.f32 %v639, %v799
        %801 = vmatprep.mubr.f32.mxu0 %v367
        %802 = vmatmul.mubr.f32.gmra.mrb[0].mxu0 %v366
        %v803 = vpop.f32.mrb[0].mxu0
        %v804 = vadd.f32 %v643, %v803
        %v805 = vpop.f32.mrb[0].mxu0
        %v806 = vadd.f32 %v645, %v805
        %807 = vmatprep.mubr.f32.mxu0 %v371
        %808 = vmatmul.mubr.f32.gmra.mrb[0].mxu0 %v370
        %v809 = vpop.f32.mrb[0].mxu0
        %v810 = vadd.f32 %v649, %v809
        %v811 = vpop.f32.mrb[0].mxu0
        %v812 = vadd.f32 %v651, %v811
        %813 = vmatprep.mubr.f32.mxu0 %v375
        %814 = vmatmul.mubr.f32.gmra.mrb[0].mxu0 %v374
        %v815 = vpop.f32.mrb[0].mxu0
        %v816 = vadd.f32 %v655, %v815
        %v817 = vpop.f32.mrb[0].mxu0
        %v818 = vadd.f32 %v657, %v817
        %819 = vmatprep.mubr.f32.mxu0 %v379
        %820 = vmatmul.mubr.f32.gmra.mrb[0].mxu0 %v378
        %v821 = vpop.f32.mrb[0].mxu0
        %v822 = vadd.f32 %v661, %v821
        %v823 = vpop.f32.mrb[0].mxu0
        %v824 = vadd.f32 %v663, %v823
        %825 = vmatprep.mubr.f32.mxu0 %v383
        %826 = vmatmul.mubr.f32.gmra.mrb[0].mxu0 %v382
        %v827 = vpop.f32.mrb[0].mxu0
        %v828 = vadd.f32 %v667, %v827
        %v829 = vpop.f32.mrb[0].mxu0
        %v830 = vadd.f32 %v669, %v829
        %831 = vmatprep.mubr.f32.mxu0 %v387
        %832 = vmatmul.mubr.f32.gmra.mrb[0].mxu0 %v386
        %v833 = vpop.f32.mrb[0].mxu0
        %v834 = vadd.f32 %v673, %v833
        %v835 = vpop.f32.mrb[0].mxu0
        %v836 = vadd.f32 %v675, %v835
        %837 = vdwg.mxu0
        %v838 = vld [vmem:[%s4] sm:$0x1]
        %v840 = vlaneseq
        %v841 = vshrl.u32 %v840, 7
        %v842 = vsub.s32 0, %v841
        %v843 = vrot.slane %v838, %v842
        %v845 = vadd.f32 %v744, %v843
        %v846 = vadd.f32 %v750, %v843
        %v847 = vadd.f32 %v756, %v843
        %v848 = vadd.f32 %v762, %v843
        %v849 = vadd.f32 %v768, %v843
        %v850 = vadd.f32 %v774, %v843
        %v851 = vadd.f32 %v780, %v843
        %v852 = vadd.f32 %v786, %v843
        %v853 = vadd.f32 %v792, %v843
        %v854 = vadd.f32 %v798, %v843
        %v855 = vadd.f32 %v804, %v843
        %v856 = vadd.f32 %v810, %v843
        %v857 = vadd.f32 %v816, %v843
        %v858 = vadd.f32 %v822, %v843
        %v859 = vadd.f32 %v828, %v843
        %v860 = vadd.f32 %v834, %v843
        %v861 = vtanh.pop %v845
        %v862 = vtanh.pop %v846
        %v863 = vtanh.pop %v847
        %v864 = vtanh.pop %v848
        %v865 = vtanh.pop %v849
        %v866 = vtanh.pop %v850
        %v867 = vtanh.pop %v851
        %v868 = vtanh.pop %v852
        %v869 = vtanh.pop %v853
        %v870 = vtanh.pop %v854
        %v871 = vtanh.pop %v855
        %v872 = vtanh.pop %v856
        %v873 = vtanh.pop %v857
        %v874 = vtanh.pop %v858
        %v875 = vtanh.pop %v859
        %v876 = vtanh.pop %v860
        %v877 = vld [vmem:[%s5] sm:$0x1]
        %v879 = vlaneseq
        %v880 = vshrl.u32 %v879, 7
        %v881 = vsub.s32 0, %v880
        %v882 = vrot.slane %v877, %v881
        %v884 = vadd.f32 %v746, %v882
        %v885 = vadd.f32 %v752, %v882
        %v886 = vadd.f32 %v758, %v882
        %v887 = vadd.f32 %v764, %v882
        %v888 = vadd.f32 %v770, %v882
        %v889 = vadd.f32 %v776, %v882
        %v890 = vadd.f32 %v782, %v882
        %v891 = vadd.f32 %v788, %v882
        %v892 = vadd.f32 %v794, %v882
        %v893 = vadd.f32 %v800, %v882
        %v894 = vadd.f32 %v806, %v882
        %v895 = vadd.f32 %v812, %v882
        %v896 = vadd.f32 %v818, %v882
        %v897 = vadd.f32 %v824, %v882
        %v898 = vadd.f32 %v830, %v882
        %v899 = vadd.f32 %v836, %v882
        %v900 = vxor.u32 %v884, 2147483648
        %v901 = vxor.u32 %v885, 2147483648
        %v902 = vxor.u32 %v886, 2147483648
        %v903 = vxor.u32 %v887, 2147483648
        %v904 = vxor.u32 %v888, 2147483648
        %v905 = vxor.u32 %v889, 2147483648
        %v906 = vxor.u32 %v890, 2147483648
        %v907 = vxor.u32 %v891, 2147483648
        %v908 = vxor.u32 %v892, 2147483648
        %v909 = vxor.u32 %v893, 2147483648
        %v910 = vxor.u32 %v894, 2147483648
        %v911 = vxor.u32 %v895, 2147483648
        %v912 = vxor.u32 %v896, 2147483648
        %v913 = vxor.u32 %v897, 2147483648
        %v914 = vxor.u32 %v898, 2147483648
        %v915 = vxor.u32 %v899, 2147483648
        %v916 = vmul.f32 %v900, 1.442695
        %v917 = vpow.pop %v916
        %v918 = vmul.f32 %v901, 1.442695
        %v919 = vpow.pop %v918
        %v920 = vmul.f32 %v902, 1.442695
        %v921 = vpow.pop %v920
        %v922 = vmul.f32 %v903, 1.442695
        %v923 = vpow.pop %v922
        %v924 = vmul.f32 %v904, 1.442695
        %v925 = vpow.pop %v924
        %v926 = vmul.f32 %v905, 1.442695
        %v927 = vpow.pop %v926
        %v928 = vmul.f32 %v906, 1.442695
        %v929 = vpow.pop %v928
        %v930 = vmul.f32 %v907, 1.442695
        %v931 = vpow.pop %v930
        %v932 = vmul.f32 %v908, 1.442695
        %v933 = vpow.pop %v932
        %v934 = vmul.f32 %v909, 1.442695
        %v935 = vpow.pop %v934
        %v936 = vmul.f32 %v910, 1.442695
        %v937 = vpow.pop %v936
        %v938 = vmul.f32 %v911, 1.442695
        %v939 = vpow.pop %v938
        %v940 = vmul.f32 %v912, 1.442695
        %v941 = vpow.pop %v940
        %v942 = vmul.f32 %v913, 1.442695
        %v943 = vpow.pop %v942
        %v944 = vmul.f32 %v914, 1.442695
        %v945 = vpow.pop %v944
        %v946 = vmul.f32 %v915, 1.442695
        %v947 = vpow.pop %v946
        %v948 = vadd.f32 %v917, 1.0
        %v949 = vadd.f32 %v919, 1.0
        %v950 = vadd.f32 %v921, 1.0
        %v951 = vadd.f32 %v923, 1.0
        %v952 = vadd.f32 %v925, 1.0
        %v953 = vadd.f32 %v927, 1.0
        %v954 = vadd.f32 %v929, 1.0
        %v955 = vadd.f32 %v931, 1.0
        %v956 = vadd.f32 %v933, 1.0
        %v957 = vadd.f32 %v935, 1.0
        %v958 = vadd.f32 %v937, 1.0
        %v959 = vadd.f32 %v939, 1.0
        %v960 = vadd.f32 %v941, 1.0
        %v961 = vadd.f32 %v943, 1.0
        %v962 = vadd.f32 %v945, 1.0
        %v963 = vadd.f32 %v947, 1.0
        %v964 = vrcp.pop %v948
        %v965 = vmul.f32 1.0, %v964
        %v966 = vrcp.pop %v949
        %v967 = vmul.f32 1.0, %v966
        %v968 = vrcp.pop %v950
        %v969 = vmul.f32 1.0, %v968
        %v970 = vrcp.pop %v951
        %v971 = vmul.f32 1.0, %v970
        %v972 = vrcp.pop %v952
        %v973 = vmul.f32 1.0, %v972
        %v974 = vrcp.pop %v953
        %v975 = vmul.f32 1.0, %v974
        %v976 = vrcp.pop %v954
        %v977 = vmul.f32 1.0, %v976
        %v978 = vrcp.pop %v955
        %v979 = vmul.f32 1.0, %v978
        %v980 = vrcp.pop %v956
        %v981 = vmul.f32 1.0, %v980
        %v982 = vrcp.pop %v957
        %v983 = vmul.f32 1.0, %v982
        %v984 = vrcp.pop %v958
        %v985 = vmul.f32 1.0, %v984
        %v986 = vrcp.pop %v959
        %v987 = vmul.f32 1.0, %v986
        %v988 = vrcp.pop %v960
        %v989 = vmul.f32 1.0, %v988
        %v990 = vrcp.pop %v961
        %v991 = vmul.f32 1.0, %v990
        %v992 = vrcp.pop %v962
        %v993 = vmul.f32 1.0, %v992
        %v994 = vrcp.pop %v963
        %v995 = vmul.f32 1.0, %v994
        %v996 = vmul.f32 %v861, %v965
        %v997 = vmul.f32 %v862, %v967
        %v998 = vmul.f32 %v863, %v969
        %v999 = vmul.f32 %v864, %v971
        %v1000 = vmul.f32 %v865, %v973
        %v1001 = vmul.f32 %v866, %v975
        %v1002 = vmul.f32 %v867, %v977
        %v1003 = vmul.f32 %v868, %v979
        %v1004 = vmul.f32 %v869, %v981
        %v1005 = vmul.f32 %v870, %v983
        %v1006 = vmul.f32 %v871, %v985
        %v1007 = vmul.f32 %v872, %v987
        %v1008 = vmul.f32 %v873, %v989
        %v1009 = vmul.f32 %v874, %v991
        %v1010 = vmul.f32 %v875, %v993
        %v1011 = vmul.f32 %v876, %v995
        %v1012 = vld [vmem:[%s3] sm:$0x1]
        %v1014 = vlaneseq
        %v1015 = vshrl.u32 %v1014, 7
        %v1016 = vsub.s32 0, %v1015
        %v1017 = vrot.slane %v1012, %v1016
        %v1019 = vmul.f32 %v996, %v1017
        %v1020 = vmul.f32 %v997, %v1017
        %v1021 = vmul.f32 %v998, %v1017
        %v1022 = vmul.f32 %v999, %v1017
        %v1023 = vmul.f32 %v1000, %v1017
        %v1024 = vmul.f32 %v1001, %v1017
        %v1025 = vmul.f32 %v1002, %v1017
        %v1026 = vmul.f32 %v1003, %v1017
        %v1027 = vmul.f32 %v1004, %v1017
        %v1028 = vmul.f32 %v1005, %v1017
        %v1029 = vmul.f32 %v1006, %v1017
        %v1030 = vmul.f32 %v1007, %v1017
        %v1031 = vmul.f32 %v1008, %v1017
        %v1032 = vmul.f32 %v1009, %v1017
        %v1033 = vmul.f32 %v1010, %v1017
        %v1034 = vmul.f32 %v1011, %v1017
        %1035 = vadd.xlane.f32.xlu0 %v1019
        %v1036 = vpop.xlane.xlu0 %1035
        %1037 = vadd.xlane.f32.xlu0 %v1020
        %v1038 = vpop.xlane.xlu0 %1037
        %1039 = vadd.xlane.f32.xlu0 %v1021
        %v1040 = vpop.xlane.xlu0 %1039
        %1041 = vadd.xlane.f32.xlu0 %v1022
        %v1042 = vpop.xlane.xlu0 %1041
        %1043 = vadd.xlane.f32.xlu0 %v1023
        %v1044 = vpop.xlane.xlu0 %1043
        %1045 = vadd.xlane.f32.xlu0 %v1024
        %v1046 = vpop.xlane.xlu0 %1045
        %1047 = vadd.xlane.f32.xlu0 %v1025
        %v1048 = vpop.xlane.xlu0 %1047
        %1049 = vadd.xlane.f32.xlu0 %v1026
        %v1050 = vpop.xlane.xlu0 %1049
        %1051 = vadd.xlane.f32.xlu0 %v1027
        %v1052 = vpop.xlane.xlu0 %1051
        %1053 = vadd.xlane.f32.xlu0 %v1028
        %v1054 = vpop.xlane.xlu0 %1053
        %1055 = vadd.xlane.f32.xlu0 %v1029
        %v1056 = vpop.xlane.xlu0 %1055
        %1057 = vadd.xlane.f32.xlu0 %v1030
        %v1058 = vpop.xlane.xlu0 %1057
        %1059 = vadd.xlane.f32.xlu0 %v1031
        %v1060 = vpop.xlane.xlu0 %1059
        %1061 = vadd.xlane.f32.xlu0 %v1032
        %v1062 = vpop.xlane.xlu0 %1061
        %1063 = vadd.xlane.f32.xlu0 %v1033
        %v1064 = vpop.xlane.xlu0 %1063
        %1065 = vadd.xlane.f32.xlu0 %v1034
        %v1066 = vpop.xlane.xlu0 %1065
        %s1067 = sld [smem:[#allocation11]]
        %v1068 = vstv %s1067
        %v1069 = vadd.f32 %v1036, %v1068
        %v1070 = vadd.f32 %v1038, %v1068
        %v1071 = vadd.f32 %v1040, %v1068
        %v1072 = vadd.f32 %v1042, %v1068
        %v1073 = vadd.f32 %v1044, %v1068
        %v1074 = vadd.f32 %v1046, %v1068
        %v1075 = vadd.f32 %v1048, %v1068
        %v1076 = vadd.f32 %v1050, %v1068
        %v1077 = vadd.f32 %v1052, %v1068
        %v1078 = vadd.f32 %v1054, %v1068
        %v1079 = vadd.f32 %v1056, %v1068
        %v1080 = vadd.f32 %v1058, %v1068
        %v1081 = vadd.f32 %v1060, %v1068
        %v1082 = vadd.f32 %v1062, %v1068
        %v1083 = vadd.f32 %v1064, %v1068
        %v1084 = vadd.f32 %v1066, %v1068
        %v1085 = vld [vmem:[%s2] sm:$0xf]
        %v1087 = vlaneseq
        %v1088 = vshrl.u32 %v1087, 7
        %v1089 = vsub.s32 0, %v1088
        %v1090 = vrot.slane %v1085, %v1089
        %v1091 = vlaneseq
        %v1092 = vshrl.u32 %v1091, 7
        %v1093 = vsub.s32 1, %v1092
        %v1094 = vrot.slane %v1085, %v1093
        %v1095 = vlaneseq
        %v1096 = vshrl.u32 %v1095, 7
        %v1097 = vsub.s32 2, %v1096
        %v1098 = vrot.slane %v1085, %v1097
        %v1099 = vlaneseq
        %v1100 = vshrl.u32 %v1099, 7
        %v1101 = vsub.s32 3, %v1100
        %v1102 = vrot.slane %v1085, %v1101
        %v1107 = vmul.f32 %v324, %v1090
        %v1108 = vmul.f32 %v325, %v1094
        %v1109 = vmul.f32 %v326, %v1098
        %v1110 = vmul.f32 %v327, %v1102
        %v1111 = vmul.f32 %v328, %v1090
        %v1112 = vmul.f32 %v329, %v1094
        %v1113 = vmul.f32 %v330, %v1098
        %v1114 = vmul.f32 %v331, %v1102
        %v1115 = vmul.f32 %v332, %v1090
        %v1116 = vmul.f32 %v333, %v1094
        %v1117 = vmul.f32 %v334, %v1098
        %v1118 = vmul.f32 %v335, %v1102
        %v1119 = vmul.f32 %v336, %v1090
        %v1120 = vmul.f32 %v337, %v1094
        %v1121 = vmul.f32 %v338, %v1098
        %v1122 = vmul.f32 %v339, %v1102
        %v1123 = vmul.f32 %v340, %v1090
        %v1124 = vmul.f32 %v341, %v1094
        %v1125 = vmul.f32 %v342, %v1098
        %v1126 = vmul.f32 %v343, %v1102
        %v1127 = vmul.f32 %v344, %v1090
        %v1128 = vmul.f32 %v345, %v1094
        %v1129 = vmul.f32 %v346, %v1098
        %v1130 = vmul.f32 %v347, %v1102
        %v1131 = vmul.f32 %v348, %v1090
        %v1132 = vmul.f32 %v349, %v1094
        %v1133 = vmul.f32 %v350, %v1098
        %v1134 = vmul.f32 %v351, %v1102
        %v1135 = vmul.f32 %v352, %v1090
        %v1136 = vmul.f32 %v353, %v1094
        %v1137 = vmul.f32 %v354, %v1098
        %v1138 = vmul.f32 %v355, %v1102
        %v1139 = vmul.f32 %v356, %v1090
        %v1140 = vmul.f32 %v357, %v1094
        %v1141 = vmul.f32 %v358, %v1098
        %v1142 = vmul.f32 %v359, %v1102
        %v1143 = vmul.f32 %v360, %v1090
        %v1144 = vmul.f32 %v361, %v1094
        %v1145 = vmul.f32 %v362, %v1098
        %v1146 = vmul.f32 %v363, %v1102
        %v1147 = vmul.f32 %v364, %v1090
        %v1148 = vmul.f32 %v365, %v1094
        %v1149 = vmul.f32 %v366, %v1098
        %v1150 = vmul.f32 %v367, %v1102
        %v1151 = vmul.f32 %v368, %v1090
        %v1152 = vmul.f32 %v369, %v1094
        %v1153 = vmul.f32 %v370, %v1098
        %v1154 = vmul.f32 %v371, %v1102
        %v1155 = vmul.f32 %v372, %v1090
        %v1156 = vmul.f32 %v373, %v1094
        %v1157 = vmul.f32 %v374, %v1098
        %v1158 = vmul.f32 %v375, %v1102
        %v1159 = vmul.f32 %v376, %v1090
        %v1160 = vmul.f32 %v377, %v1094
        %v1161 = vmul.f32 %v378, %v1098
        %v1162 = vmul.f32 %v379, %v1102
        %v1163 = vmul.f32 %v380, %v1090
        %v1164 = vmul.f32 %v381, %v1094
        %v1165 = vmul.f32 %v382, %v1098
        %v1166 = vmul.f32 %v383, %v1102
        %v1167 = vmul.f32 %v384, %v1090
        %v1168 = vmul.f32 %v385, %v1094
        %v1169 = vmul.f32 %v386, %v1098
        %v1170 = vmul.f32 %v387, %v1102
        %v1171 = vadd.f32 %v1107, %v1108
        %v1172 = vadd.f32 %v1171, %v1109
        %v1173 = vadd.f32 %v1172, %v1110
        %1174 = vadd.xlane.f32.xlu0 %v1173
        %v1175 = vpop.xlane.xlu0 %1174
        %v1176 = vadd.f32 %v1111, %v1112
        %v1177 = vadd.f32 %v1176, %v1113
        %v1178 = vadd.f32 %v1177, %v1114
        %1179 = vadd.xlane.f32.xlu0 %v1178
        %v1180 = vpop.xlane.xlu0 %1179
        %v1181 = vadd.f32 %v1115, %v1116
        %v1182 = vadd.f32 %v1181, %v1117
        %v1183 = vadd.f32 %v1182, %v1118
        %1184 = vadd.xlane.f32.xlu0 %v1183
        %v1185 = vpop.xlane.xlu0 %1184
        %v1186 = vadd.f32 %v1119, %v1120
        %v1187 = vadd.f32 %v1186, %v1121
        %v1188 = vadd.f32 %v1187, %v1122
        %1189 = vadd.xlane.f32.xlu0 %v1188
        %v1190 = vpop.xlane.xlu0 %1189
        %v1191 = vadd.f32 %v1123, %v1124
        %v1192 = vadd.f32 %v1191, %v1125
        %v1193 = vadd.f32 %v1192, %v1126
        %1194 = vadd.xlane.f32.xlu0 %v1193
        %v1195 = vpop.xlane.xlu0 %1194
        %v1196 = vadd.f32 %v1127, %v1128
        %v1197 = vadd.f32 %v1196, %v1129
        %v1198 = vadd.f32 %v1197, %v1130
        %1199 = vadd.xlane.f32.xlu0 %v1198
        %v1200 = vpop.xlane.xlu0 %1199
        %v1201 = vadd.f32 %v1131, %v1132
        %v1202 = vadd.f32 %v1201, %v1133
        %v1203 = vadd.f32 %v1202, %v1134
        %1204 = vadd.xlane.f32.xlu0 %v1203
        %v1205 = vpop.xlane.xlu0 %1204
        %v1206 = vadd.f32 %v1135, %v1136
        %v1207 = vadd.f32 %v1206, %v1137
        %v1208 = vadd.f32 %v1207, %v1138
        %1209 = vadd.xlane.f32.xlu0 %v1208
        %v1210 = vpop.xlane.xlu0 %1209
        %v1211 = vadd.f32 %v1139, %v1140
        %v1212 = vadd.f32 %v1211, %v1141
        %v1213 = vadd.f32 %v1212, %v1142
        %1214 = vadd.xlane.f32.xlu0 %v1213
        %v1215 = vpop.xlane.xlu0 %1214
        %v1216 = vadd.f32 %v1143, %v1144
        %v1217 = vadd.f32 %v1216, %v1145
        %v1218 = vadd.f32 %v1217, %v1146
        %1219 = vadd.xlane.f32.xlu0 %v1218
        %v1220 = vpop.xlane.xlu0 %1219
        %v1221 = vadd.f32 %v1147, %v1148
        %v1222 = vadd.f32 %v1221, %v1149
        %v1223 = vadd.f32 %v1222, %v1150
        %1224 = vadd.xlane.f32.xlu0 %v1223
        %v1225 = vpop.xlane.xlu0 %1224
        %v1226 = vadd.f32 %v1151, %v1152
        %v1227 = vadd.f32 %v1226, %v1153
        %v1228 = vadd.f32 %v1227, %v1154
        %1229 = vadd.xlane.f32.xlu0 %v1228
        %v1230 = vpop.xlane.xlu0 %1229
        %v1231 = vadd.f32 %v1155, %v1156
        %v1232 = vadd.f32 %v1231, %v1157
        %v1233 = vadd.f32 %v1232, %v1158
        %1234 = vadd.xlane.f32.xlu0 %v1233
        %v1235 = vpop.xlane.xlu0 %1234
        %v1236 = vadd.f32 %v1159, %v1160
        %v1237 = vadd.f32 %v1236, %v1161
        %v1238 = vadd.f32 %v1237, %v1162
        %1239 = vadd.xlane.f32.xlu0 %v1238
        %v1240 = vpop.xlane.xlu0 %1239
        %v1241 = vadd.f32 %v1163, %v1164
        %v1242 = vadd.f32 %v1241, %v1165
        %v1243 = vadd.f32 %v1242, %v1166
        %1244 = vadd.xlane.f32.xlu0 %v1243
        %v1245 = vpop.xlane.xlu0 %1244
        %v1246 = vadd.f32 %v1167, %v1168
        %v1247 = vadd.f32 %v1246, %v1169
        %v1248 = vadd.f32 %v1247, %v1170
        %1249 = vadd.xlane.f32.xlu0 %v1248
        %v1250 = vpop.xlane.xlu0 %1249
        %v1251 = vmax.f32 %v1069, %v1073
        %v1252 = vmax.f32 %v1070, %v1074
        %v1253 = vmax.f32 %v1071, %v1075
        %v1254 = vmax.f32 %v1072, %v1076
        %v1255 = vmax.f32 %v1251, %v1077
        %v1256 = vmax.f32 %v1252, %v1078
        %v1257 = vmax.f32 %v1253, %v1079
        %v1258 = vmax.f32 %v1254, %v1080
        %v1259 = vmax.f32 %v1255, %v1081
        %v1260 = vmax.f32 %v1256, %v1082
        %v1261 = vmax.f32 %v1257, %v1083
        %v1262 = vmax.f32 %v1258, %v1084
        %v1263 = vmax.f32 %v1259, %v1260
        %v1264 = vmax.f32 %v1261, %v1262
        %v1265 = vmax.f32 %v1263, %v1264
        %v1266 = vrot.slane %v1265, 4
        %v1267 = vmax.f32 %v1265, %v1266
        %v1268 = vrot.slane %v1267, 2
        %v1269 = vmax.f32 %v1267, %v1268
        %v1270 = vrot.slane %v1269, 1
        %v1271 = vmax.f32 %v1269, %v1270
        %v1272 = vld [vmem:[#allocation2] sm:$0x1]
        %v1273 = vmax.f32 %v1272, %v1271
        %v1274 = vsub.f32 %v1272, %v1273
        %v1275 = vmul.f32 %v1274, 1.442695
        %v1276 = vpow.pop %v1275
        %v1278 = vlaneseq
        %v1279 = vshrl.u32 %v1278, 7
        %v1280 = vsub.s32 0, %v1279
        %v1281 = vrot.slane %v1273, %v1280
        %v1283 = vsub.f32 %v1069, %v1281
        %v1284 = vsub.f32 %v1070, %v1281
        %v1285 = vsub.f32 %v1071, %v1281
        %v1286 = vsub.f32 %v1072, %v1281
        %v1287 = vsub.f32 %v1073, %v1281
        %v1288 = vsub.f32 %v1074, %v1281
        %v1289 = vsub.f32 %v1075, %v1281
        %v1290 = vsub.f32 %v1076, %v1281
        %v1291 = vsub.f32 %v1077, %v1281
        %v1292 = vsub.f32 %v1078, %v1281
        %v1293 = vsub.f32 %v1079, %v1281
        %v1294 = vsub.f32 %v1080, %v1281
        %v1295 = vsub.f32 %v1081, %v1281
        %v1296 = vsub.f32 %v1082, %v1281
        %v1297 = vsub.f32 %v1083, %v1281
        %v1298 = vsub.f32 %v1084, %v1281
        %v1299 = vmul.f32 %v1283, 1.442695
        %v1300 = vpow.pop %v1299
        %v1301 = vmul.f32 %v1284, 1.442695
        %v1302 = vpow.pop %v1301
        %v1303 = vmul.f32 %v1285, 1.442695
        %v1304 = vpow.pop %v1303
        %v1305 = vmul.f32 %v1286, 1.442695
        %v1306 = vpow.pop %v1305
        %v1307 = vmul.f32 %v1287, 1.442695
        %v1308 = vpow.pop %v1307
        %v1309 = vmul.f32 %v1288, 1.442695
        %v1310 = vpow.pop %v1309
        %v1311 = vmul.f32 %v1289, 1.442695
        %v1312 = vpow.pop %v1311
        %v1313 = vmul.f32 %v1290, 1.442695
        %v1314 = vpow.pop %v1313
        %v1315 = vmul.f32 %v1291, 1.442695
        %v1316 = vpow.pop %v1315
        %v1317 = vmul.f32 %v1292, 1.442695
        %v1318 = vpow.pop %v1317
        %v1319 = vmul.f32 %v1293, 1.442695
        %v1320 = vpow.pop %v1319
        %v1321 = vmul.f32 %v1294, 1.442695
        %v1322 = vpow.pop %v1321
        %v1323 = vmul.f32 %v1295, 1.442695
        %v1324 = vpow.pop %v1323
        %v1325 = vmul.f32 %v1296, 1.442695
        %v1326 = vpow.pop %v1325
        %v1327 = vmul.f32 %v1297, 1.442695
        %v1328 = vpow.pop %v1327
        %v1329 = vmul.f32 %v1298, 1.442695
        %v1330 = vpow.pop %v1329
        %v1331 = vld [vmem:[#allocation3] sm:$0x1]
        %v1332 = vmul.f32 %v1276, %v1331
        %v1333 = vmul.f32 %v1300, %v1175
        %v1334 = vmul.f32 %v1302, %v1180
        %v1335 = vmul.f32 %v1304, %v1185
        %v1336 = vmul.f32 %v1306, %v1190
        %v1337 = vmul.f32 %v1308, %v1195
        %v1338 = vmul.f32 %v1310, %v1200
        %v1339 = vmul.f32 %v1312, %v1205
        %v1340 = vmul.f32 %v1314, %v1210
        %v1341 = vmul.f32 %v1316, %v1215
        %v1342 = vmul.f32 %v1318, %v1220
        %v1343 = vmul.f32 %v1320, %v1225
        %v1344 = vmul.f32 %v1322, %v1230
        %v1345 = vmul.f32 %v1324, %v1235
        %v1346 = vmul.f32 %v1326, %v1240
        %v1347 = vmul.f32 %v1328, %v1245
        %v1348 = vmul.f32 %v1330, %v1250
        %vm1349 = vcmask 7168
        %v1350 = vsel %vm1349, %v1333, 0.0
        %v1351 = vsel %vm1349, %v1334, 0.0
        %v1352 = vadd.f32 %v1350, %v1351
        %v1353 = vsel %vm1349, %v1335, 0.0
        %v1354 = vadd.f32 %v1352, %v1353
        %v1355 = vsel %vm1349, %v1336, 0.0
        %v1356 = vadd.f32 %v1354, %v1355
        %v1357 = vsel %vm1349, %v1337, 0.0
        %v1358 = vadd.f32 %v1356, %v1357
        %v1359 = vsel %vm1349, %v1338, 0.0
        %v1360 = vadd.f32 %v1358, %v1359
        %v1361 = vsel %vm1349, %v1339, 0.0
        %v1362 = vadd.f32 %v1360, %v1361
        %v1363 = vsel %vm1349, %v1340, 0.0
        %v1364 = vadd.f32 %v1362, %v1363
        %v1365 = vsel %vm1349, %v1341, 0.0
        %v1366 = vadd.f32 %v1364, %v1365
        %v1367 = vsel %vm1349, %v1342, 0.0
        %v1368 = vadd.f32 %v1366, %v1367
        %v1369 = vsel %vm1349, %v1343, 0.0
        %v1370 = vadd.f32 %v1368, %v1369
        %v1371 = vsel %vm1349, %v1344, 0.0
        %v1372 = vadd.f32 %v1370, %v1371
        %v1373 = vsel %vm1349, %v1345, 0.0
        %v1374 = vadd.f32 %v1372, %v1373
        %v1375 = vsel %vm1349, %v1346, 0.0
        %v1376 = vadd.f32 %v1374, %v1375
        %v1377 = vsel %vm1349, %v1347, 0.0
        %v1378 = vadd.f32 %v1376, %v1377
        %v1379 = vsel %vm1349, %v1348, 0.0
        %v1380 = vadd.f32 %v1378, %v1379
        %v1381 = vrot.slane %v1380, 4
        %v1382 = vadd.f32 %v1380, %v1381
        %v1383 = vrot.slane %v1382, 2
        %v1384 = vadd.f32 %v1382, %v1383
        %v1385 = vrot.slane %v1384, 1
        %v1386 = vadd.f32 %v1384, %v1385
        %v1387 = vadd.f32 %v1332, %v1386
        %vm1388 = vcmask 0
        %1389 = vst.msk [vmem:[#allocation3] sm:$0x1] %vm1388, %v1387
        %v1390 = vld [vmem:[#allocation4] sm:$0x1]
        %v1391 = vmul.f32 %v1276, %v1390
        %v1392 = vsel %vm1349, %v1300, 0.0
        %v1393 = vsel %vm1349, %v1302, 0.0
        %v1394 = vadd.f32 %v1392, %v1393
        %v1395 = vsel %vm1349, %v1304, 0.0
        %v1396 = vadd.f32 %v1394, %v1395
        %v1397 = vsel %vm1349, %v1306, 0.0
        %v1398 = vadd.f32 %v1396, %v1397
        %v1399 = vsel %vm1349, %v1308, 0.0
        %v1400 = vadd.f32 %v1398, %v1399
        %v1401 = vsel %vm1349, %v1310, 0.0
        %v1402 = vadd.f32 %v1400, %v1401
        %v1403 = vsel %vm1349, %v1312, 0.0
        %v1404 = vadd.f32 %v1402, %v1403
        %v1405 = vsel %vm1349, %v1314, 0.0
        %v1406 = vadd.f32 %v1404, %v1405
        %v1407 = vsel %vm1349, %v1316, 0.0
        %v1408 = vadd.f32 %v1406, %v1407
        %v1409 = vsel %vm1349, %v1318, 0.0
        %v1410 = vadd.f32 %v1408, %v1409
        %v1411 = vsel %vm1349, %v1320, 0.0
        %v1412 = vadd.f32 %v1410, %v1411
        %v1413 = vsel %vm1349, %v1322, 0.0
        %v1414 = vadd.f32 %v1412, %v1413
        %v1415 = vsel %vm1349, %v1324, 0.0
        %v1416 = vadd.f32 %v1414, %v1415
        %v1417 = vsel %vm1349, %v1326, 0.0
        %v1418 = vadd.f32 %v1416, %v1417
        %v1419 = vsel %vm1349, %v1328, 0.0
        %v1420 = vadd.f32 %v1418, %v1419
        %v1421 = vsel %vm1349, %v1330, 0.0
        %v1422 = vadd.f32 %v1420, %v1421
        %v1423 = vrot.slane %v1422, 4
        %v1424 = vadd.f32 %v1422, %v1423
        %v1425 = vrot.slane %v1424, 2
        %v1426 = vadd.f32 %v1424, %v1425
        %v1427 = vrot.slane %v1426, 1
        %v1428 = vadd.f32 %v1426, %v1427
        %v1429 = vadd.f32 %v1391, %v1428
        %1430 = vst.msk [vmem:[#allocation4] sm:$0x1] %vm1388, %v1429
        %1431 = vst.msk [vmem:[#allocation2] sm:$0x1] %vm1388, %v1273
        %p1432 = scmp.eq.s32.totalorder %s24, 3
        // Predicated region
        $region65: #{attention_with_survival_classifier.1} parent=47 // pred_check
          %p1433 = pneg %p1432
        $region66: #{attention_with_survival_classifier.1} parent=47 // pred_check_branch
          %1435 = sbr.rel (%p1433) target = $region68
        $region67: #{attention_with_survival_classifier.1} parent=47 // pred_region
          %v1436 = vld [vmem:[#allocation3] sm:$0x1]
          %v1437 = vld [vmem:[#allocation4] sm:$0x1]
          %v1438 = vrcp.pop %v1437
          %v1439 = vmul.f32 %v1436, %v1438
          %s1440 = sld [smem:[#allocation11 + $0x1]]
          %v1441 = vstv %s1440
          %v1442 = vadd.f32 %v1439, %v1441
          %1443 = vst.msk [vmem:[#allocation12] sm:$0x1] %vm1388, %v1442
        $region68: #{attention_with_survival_classifier.1} parent=47 // pred_fallthru
          _
        // Predicated region
        $region69: #{attention_with_survival_classifier.1} parent=47 // pred_check
          %p1444 = pneg %p189
        $region70: #{attention_with_survival_classifier.1} parent=47 // pred_check_branch
          %1446 = sbr.rel (%p1444) target = $region72
        $region71: #{attention_with_survival_classifier.1} parent=47 // pred_region
          %s1448 = ssub.s32 16, 16
          %1449 = vsyncadd [#allocation7], %s1448
          %s1451 = sshll.u32 [#allocation12], 4
          %s1452 = int_to_ptr.vmem [resolvable:$true] %s1451
          %1454 = dma.vmem_to_hbm [thread:$0]  %s1452, 16, %s7, [#allocation7]
        $region72: #{attention_with_survival_classifier.1} parent=47 // pred_fallthru
          _
        // Predicated region
        $region73: #{attention_with_survival_classifier.1} parent=47 // pred_check
          %p1455 = pneg %p189
        $region74: #{attention_with_survival_classifier.1} parent=47 // pred_check_branch
          %1457 = sbr.rel (%p1455) target = $region76
        $region75: #{attention_with_survival_classifier.1} parent=47 // pred_region
          %1458 = dma.done [#allocation7], 16
        $region76: #{attention_with_survival_classifier.1} parent=47 // pred_fallthru
          _
      $region48: #{attention_with_survival_classifier.1} parent=5 // pred_fallthru
        _
      %p1459 = scmp.le.s32.totalorder 2, %s19
      // Predicated region
      $region77: #{attention_with_survival_classifier.1} parent=5 // pred_check
        %p1460 = pneg %p1459
      $region78: #{attention_with_survival_classifier.1} parent=5 // pred_check_branch
        %1462 = sbr.rel (%p1460) target = $region80
      $region79: #{attention_with_survival_classifier.1} parent=5 // pred_region
        %s1463 = ssub.s32 %s19, 2
      $region80: #{attention_with_survival_classifier.1} parent=5 // pred_fallthru
        _
    $region6: #{attention_with_survival_classifier.1} parent=1 // loop_footer
      %s23 = sadd.s32 1, %s19
    $region7: #{attention_with_survival_classifier.1} parent=1 // loop_footer_branch
      %18 = sbr.rel target = $region3
    $region8: #{attention_with_survival_classifier.1} parent=1 // loop_exit
      _
    %1464 = vsyncpa [#allocation6], 1
    %s1465 = scalar_lea.sflag [#allocation6], 1
    %1466 = vsyncpa %s1465, 1
    %1467 = vsyncpa [#allocation10], 1
    %1468 = vsyncpa [#allocation7], 1
    %s1469 = scalar_lea.sflag [#allocation7], 1
    %1470 = vsyncpa %s1469, 1
    %1471 = vsyncpa [#allocation8], 1
    %s1472 = scalar_lea.sflag [#allocation8], 1
    %1473 = vsyncpa %s1472, 1

</llo_original>
